<compile_context>
chip_gen: v5e
topology: v5e:2x2
jax: 0.10.0
libtpu: 0.0.40
codegen_flags: <defaults>
</compile_context>

<pallas_src>
import functools

import jax
import jax.numpy as jnp
from jax import lax
from jax.experimental import pallas as pl
from jax.experimental.pallas import tpu as pltpu


# ----------------------------------------------------------------------------
# Tap enumerations shared by the wrapper (mask / weight packing) and the kernel
# (im2col shift order).  The order must match on both sides.
# ----------------------------------------------------------------------------
# ConvTranspose3d (4,4,1)/(2,2,1)/(1,1,0) as a conv over the nearest-upsampled
# input: full-res tap offsets {-2,-1,0,+2}^2.  Each offset is used by exactly
# one output parity class, so it is pre-masked by that parity and ONE matmul
# yields the interleaved deconv output directly.
UP_DELTAS = tuple((dh, dw) for dh in (-2, -1, 0, 2) for dw in (-2, -1, 0, 2))
_KIDX = {-2: 3, -1: 2, 0: 1, 2: 0}   # tap offset -> ConvTranspose kernel index
_PAR = {-2: 0, 0: 0, -1: 1, 2: 1}    # tap offset -> output parity using it
# 3x3x1 convs, zero padding (1,1,0).
CONV_TAPS = tuple((dh, dw) for dh in (-1, 0, 1) for dw in (-1, 0, 1))


def _round_up(x, m):
    return -(-x // m) * m


def _build_masks(H, W, D):
    """(16+9, H*W*D) f32 {0,1}: deconv parity+boundary masks, conv boundary masks."""
    S = H * W * D
    p = jnp.arange(S, dtype=jnp.int32)
    h = p // (W * D)
    w = (p // D) % W
    rows = []
    for dh, dw in UP_DELTAS:
        ok = ((h + dh >= 0) & (h + dh < H) & (w + dw >= 0) & (w + dw < W)
              & (h % 2 == _PAR[dh]) & (w % 2 == _PAR[dw]))
        rows.append(ok)
    for dh, dw in CONV_TAPS:
        rows.append((h + dh >= 0) & (h + dh < H) & (w + dw >= 0) & (w + dw < W))
    return jnp.stack(rows, axis=0).astype(jnp.float32)


def _instance_norm_relu(y, eps):
    """Per-row (= per-(n, c)) InstanceNorm3d (affine=False) + ReLU.  y: (C, S) f32."""
    inv_n = 1.0 / y.shape[1]
    mean = jnp.sum(y, axis=1, keepdims=True) * inv_n
    c = y - mean
    var = jnp.sum(c * c, axis=1, keepdims=True) * inv_n   # two-pass: no cancellation
    return jnp.maximum(c * lax.rsqrt(var + eps), 0.0)


def _unet_up3_kernel(x1_ref, x2u_ref, m_ref, wup_ref, bup_ref, w1_ref, w2_ref,
                     o_ref, *, shifts_up, shifts_c, pad_cat, cout, eps):
    S = x1_ref.shape[-1]
    masks = m_ref[...]                                    # (25, S) f32, grid-invariant

    def im2col_bf16(x, shifts, row0):
        """x: (C, S) f32 -> (len(shifts)*C, S) bf16, tap t = masked lane-shift by shifts[t]."""
        blocks = []
        for t, s in enumerate(shifts):
            xs = x if s == 0 else pltpu.roll(x, (-s) % S, axis=1)   # xs[:, p] = x[:, p+s]
            blocks.append(xs * masks[row0 + t:row0 + t + 1, :])     # zero OOB / wrong parity
        return jnp.concatenate(blocks, axis=0).astype(jnp.bfloat16)

    # ---- 1. ConvTranspose3d (4,4,1)/(2,2,1)/(1,1,0): one matmul over 16 ------
    #         parity-masked taps of the nearest-upsampled input (already
    #         interleaved full-res output; no scatter / reshape needed).
    pu = im2col_bf16(x2u_ref[0], shifts_up, 0)            # (16*Cin_p, S)
    up = jnp.dot(wup_ref[...], pu,
                 preferred_element_type=jnp.float32) + bup_ref[...]   # (Cup, S) f32

    # ---- 2. concat([padded skip, up], channel axis), zero-pad to 8 rows ------
    parts = [x1_ref[0], up]
    if pad_cat:
        parts.append(jnp.zeros((pad_cat, S), jnp.float32))
    xcat = jnp.concatenate(parts, axis=0)                 # (Ccat_p, S) f32

    # ---- 3. conv1 (3,3,1)/pad(1,1,0) + InstanceNorm3d + ReLU -----------------
    p1 = im2col_bf16(xcat, shifts_c, len(shifts_up))
    y1 = jnp.dot(w1_ref[...], p1, preferred_element_type=jnp.float32)
    a1 = _instance_norm_relu(y1, eps)                     # (Cout_p, S), pad rows stay 0

    # ---- 4. conv2 (3,3,1)/pad(1,1,0) + InstanceNorm3d + ReLU -----------------
    p2 = im2col_bf16(a1, shifts_c, len(shifts_up))
    y2 = jnp.dot(w2_ref[...], p2, preferred_element_type=jnp.float32)
    a2 = _instance_norm_relu(y2, eps)
    o_ref[0] = a2[:cout, :]


def unet_up3_forward(inputs1, inputs2, params, *, eps=1e-5):
    """UnetUp3.forward (is_deconv=True, is_batchnorm=True).

    inputs1: (N, C1,  2*H2, 2*W2, D)  skip connection (first in the concat)
    inputs2: (N, Cin, H2,   W2,   D)  low-res features to be upsampled
    params (PyTorch layouts):
        w_up (Cin, Cout, 4, 4, 1), b_up (Cout,)          ConvTranspose3d
        w1   (Cout, C1+Cout, 3, 3, 1), b1 (Cout,)        UnetConv3.conv1
        w2   (Cout, Cout,    3, 3, 1), b2 (Cout,)        UnetConv3.conv2
    Returns (N, Cout, 2*H2, 2*W2, D) float32.
    """
    w_up, b_up = params["w_up"], params["b_up"]
    w1, w2 = params["w1"], params["w2"]
    # NOTE: params["b1"]/["b2"] intentionally unused: a per-channel conv bias is
    # exactly cancelled by the following InstanceNorm3d (affine=False) mean
    # subtraction.  The ConvTranspose3d bias is kept (it passes through a
    # zero-padded conv before any norm and is NOT cancelled).

    N, C1, H1, W1, D = inputs1.shape
    N2, Cin, H2, W2, D2 = inputs2.shape
    Cup = w_up.shape[1]
    Cout = w1.shape[0]
    assert N == N2 and D == D2
    assert w_up.shape == (Cin, Cup, 4, 4, 1)
    assert w1.shape[2:] == (3, 3, 1) and w2.shape[2:] == (3, 3, 1)
    assert w2.shape[1] == Cout

    Hup, Wup = 2 * H2, 2 * W2                   # ConvTranspose3d output spatial size
    offset = Hup - H1
    o2 = offset // 2
    # F.pad(inputs1, 2*[o2, o2, 0]) == pad H:(o2,0), W:(0,o2), D:(o2,o2)  (torch order)
    x1p = jnp.pad(inputs1, ((0, 0), (0, 0), (o2, 0), (0, o2), (o2, o2)))
    assert x1p.shape[2:] == (Hup, Wup, D), "padded inputs1 must match upsampled inputs2"
    assert w1.shape[1] == C1 + Cup

    S1 = Hup * Wup * D
    Cin_p = _round_up(Cin, 8)
    Ccat = C1 + Cup
    Ccat_p = _round_up(Ccat, 8)
    Cout_p = _round_up(Cout, 8)

    # Activations: one nearest-upsample of inputs2 in the wrapper (lets the kernel
    # express the transposed conv as a plain masked-tap conv); otherwise reshapes only.
    x2u = jnp.repeat(jnp.repeat(inputs2, 2, axis=2), 2, axis=3)
    if Cin_p > Cin:
        x2u = jnp.pad(x2u, ((0, 0), (0, Cin_p - Cin), (0, 0), (0, 0), (0, 0)))
    x2ur = x2u.reshape(N, Cin_p, S1).astype(jnp.float32)
    x1r = x1p.reshape(N, C1, S1).astype(jnp.float32)

    masks = _build_masks(Hup, Wup, D)            # (25, S1) f32 {0,1}, grid-invariant
    W1D = Wup * D
    shifts_up = tuple(dh * W1D + dw * D for dh, dw in UP_DELTAS)
    shifts_c = tuple(dh * W1D + dw * D for dh, dw in CONV_TAPS)

    # ----- weight packing (tiny, weight-side only; bf16 for the MXU) -----
    def pack_deconv():                           # -> (Cup, 16*Cin_p)
        blocks = []
        for dh, dw in UP_DELTAS:
            blk = jnp.transpose(w_up[:, :, _KIDX[dh], _KIDX[dw], 0])   # (Cup, Cin)
            blk = jnp.pad(blk, ((0, 0), (0, Cin_p - Cin)))
            blocks.append(blk)
        return jnp.concatenate(blocks, axis=1).astype(jnp.bfloat16)

    def pack_conv(w, ci, ci_p):                  # (Cout, ci, 3, 3, 1) -> (Cout_p, 9*ci_p)
        blocks = []
        for dh, dw in CONV_TAPS:
            blk = jnp.pad(w[:, :, dh + 1, dw + 1, 0],
                          ((0, Cout_p - Cout), (0, ci_p - ci)))
            blocks.append(blk)
        return jnp.concatenate(blocks, axis=1).astype(jnp.bfloat16)

    wup_pack = pack_deconv()                     # (Cup, 16*Cin_p)
    w1_pack = pack_conv(w1, Ccat, Ccat_p)        # (Cout_p, 9*Ccat_p)
    w2_pack = pack_conv(w2, Cout, Cout_p)        # (Cout_p, 9*Cout_p)
    bup2 = b_up.reshape(Cup, 1).astype(jnp.float32)

    kernel = functools.partial(
        _unet_up3_kernel, shifts_up=shifts_up, shifts_c=shifts_c,
        pad_cat=Ccat_p - Ccat, cout=Cout, eps=eps)

    macs = S1 * (Cup * 16 * Cin_p + Cout_p * 9 * Ccat_p + Cout_p * 9 * Cout_p)
    bytes_accessed = int(4 * (x1r.size + x2ur.size + masks.size + bup2.size
                              + N * Cout * S1)
                         + 2 * (wup_pack.size + w1_pack.size + w2_pack.size))

    out = pl.pallas_call(
        kernel,
        out_shape=jax.ShapeDtypeStruct((N, Cout, S1), jnp.float32),
        grid=(N,),
        in_specs=[
            pl.BlockSpec((1, C1, S1), lambda n: (n, 0, 0)),
            pl.BlockSpec((1, Cin_p, S1), lambda n: (n, 0, 0)),
            pl.BlockSpec((16 + 9, S1), lambda n: (0, 0)),
            pl.BlockSpec((Cup, 16 * Cin_p), lambda n: (0, 0)),
            pl.BlockSpec((Cup, 1), lambda n: (0, 0)),
            pl.BlockSpec((Cout_p, 9 * Ccat_p), lambda n: (0, 0)),
            pl.BlockSpec((Cout_p, 9 * Cout_p), lambda n: (0, 0)),
        ],
        out_specs=pl.BlockSpec((1, Cout, S1), lambda n: (n, 0, 0)),
        compiler_params=pltpu.CompilerParams(
            dimension_semantics=("parallel",),   # batch items independent (megacore)
            vmem_limit_bytes=32 * 1024 * 1024,
        ),
        cost_estimate=pl.CostEstimate(flops=2 * N * macs, transcendentals=0,
                                      bytes_accessed=bytes_accessed),
    )(x1r, x2ur, masks, wup_pack, bup2, w1_pack, w2_pack)

    return out.reshape(N, Cout, Hup, Wup, D)     # free reshape, already NC(HWD)
    # TODO(synk): the is_deconv=False branch (trilinear nn.Upsample) is not implemented.


def _reference(inputs1, inputs2, params, *, eps=1e-5):
    """Pure-XLA f32 reference of UnetUp3.forward (is_deconv=True, is_batchnorm=True)."""
    w_up, b_up = params["w_up"], params["b_up"]
    w1, b1, w2, b2 = params["w1"], params["b1"], params["w2"], params["b2"]
    dn = ("NCDHW", "OIDHW", "NCDHW")

    # ConvTranspose3d == lhs-dilated conv with the spatially flipped kernel.
    w_up_f = jnp.transpose(w_up, (1, 0, 2, 3, 4))[:, :, ::-1, ::-1, :]
    up = lax.conv_general_dilated(
        inputs2.astype(jnp.float32), w_up_f.astype(jnp.float32),
        window_strides=(1, 1, 1), padding=[(2, 2), (2, 2), (0, 0)],
        lhs_dilation=(2, 2, 1), dimension_numbers=dn,
        precision=lax.Precision.HIGHEST,
    ) + b_up[None, :, None, None, None]

    offset = up.shape[2] - inputs1.shape[2]
    o2 = offset // 2
    x1p = jnp.pad(inputs1, ((0, 0), (0, 0), (o2, 0), (0, o2), (o2, o2)))
    x = jnp.concatenate([x1p.astype(jnp.float32), up], axis=1)

    def conv_in_relu(x, w, b):
        y = lax.conv_general_dilated(
            x, w.astype(jnp.float32), window_strides=(1, 1, 1),
            padding=[(1, 1), (1, 1), (0, 0)], dimension_numbers=dn,
            precision=lax.Precision.HIGHEST,
        ) + b[None, :, None, None, None]
        m = jnp.mean(y, axis=(2, 3, 4), keepdims=True)
        v = jnp.mean((y - m) ** 2, axis=(2, 3, 4), keepdims=True)
        return jnp.maximum((y - m) * lax.rsqrt(v + eps), 0.0)

    return conv_in_relu(conv_in_relu(x, w1, b1), w2, b2)


if __name__ == "__main__":
    # UnetUp3(in_size=8, out_size=4, is_deconv=True, is_batchnorm=True).
    # inputs1 (skip connection) has in_size - out_size = 4 channels so that the
    # concat has in_size channels, as UnetConv3(in_size, out_size) expects.
    N, in_size, out_size = 2, 8, 4
    H2 = W2 = 8                        # low-res spatial dims of inputs2
    D = 4                              # third spatial dim (kernel extent 1 everywhere)
    H1, W1 = 2 * H2, 2 * W2

    key = jax.random.PRNGKey(0)
    ks = jax.random.split(key, 8)
    inputs1 = jax.random.normal(ks[0], (N, in_size - out_size, H1, W1, D), jnp.float32)
    inputs2 = jax.random.normal(ks[1], (N, in_size, H2, W2, D), jnp.float32)
    params = {
        "w_up": 0.2 * jax.random.normal(ks[2], (in_size, out_size, 4, 4, 1), jnp.float32),
        "b_up": 0.2 * jax.random.normal(ks[3], (out_size,), jnp.float32),
        "w1":   0.2 * jax.random.normal(ks[4], (out_size, in_size, 3, 3, 1), jnp.float32),
        "b1":   0.2 * jax.random.normal(ks[5], (out_size,), jnp.float32),
        "w2":   0.2 * jax.random.normal(ks[6], (out_size, out_size, 3, 3, 1), jnp.float32),
        "b2":   0.2 * jax.random.normal(ks[7], (out_size,), jnp.float32),
    }

    fwd = jax.jit(unet_up3_forward)
    out = jax.block_until_ready(fwd(inputs1, inputs2, params))

    ref = _reference(inputs1, inputs2, params)
    assert out.shape == (N, out_size, H1, W1, D), out.shape
    max_err = float(jnp.max(jnp.abs(out - ref)))
    # bf16 MXU inputs with f32 accumulation: keep a bf16-appropriate tolerance.
    assert jnp.allclose(out, ref, atol=5e-2, rtol=5e-2), f"max|err|={max_err}"
    print("KERNEL_OK")
</pallas_src>

<mosaic_0001>
module attributes {stable_mosaic.version = 11 : i64} {
  func.func @_unet_up3_kernel(%arg0: i32, %arg1: memref<1x4x1024xf32, #tpu.memory_space<vmem>>, %arg2: memref<1x8x1024xf32, #tpu.memory_space<vmem>>, %arg3: memref<25x1024xf32, #tpu.memory_space<vmem>>, %arg4: memref<4x128xbf16, #tpu.memory_space<vmem>>, %arg5: memref<4x1xf32, #tpu.memory_space<vmem>>, %arg6: memref<8x72xbf16, #tpu.memory_space<vmem>>, %arg7: memref<8x72xbf16, #tpu.memory_space<vmem>>, %arg8: memref<1x4x1024xf32, #tpu.memory_space<vmem>>) attributes {dimension_semantics = [#tpu.dimension_semantics<parallel>], iteration_bounds = array<i64: 2>, scalar_prefetch = 0 : i64, scratch_operands = 0 : i64, tpu.core_type = #tpu.core_type<tc>, window_params = [{transform_indices = @transform_0, window_bounds = array<i64: 1, 4, 1024>}, {transform_indices = @transform_1, window_bounds = array<i64: 1, 8, 1024>}, {pipeline_mode = #tpu.pipeline_mode<synchronous>, transform_indices = @transform_2, window_bounds = array<i64: 25, 1024>}, {pipeline_mode = #tpu.pipeline_mode<synchronous>, transform_indices = @transform_3, window_bounds = array<i64: 4, 128>}, {pipeline_mode = #tpu.pipeline_mode<synchronous>, transform_indices = @transform_4, window_bounds = array<i64: 4, 1>}, {pipeline_mode = #tpu.pipeline_mode<synchronous>, transform_indices = @transform_5, window_bounds = array<i64: 8, 72>}, {pipeline_mode = #tpu.pipeline_mode<synchronous>, transform_indices = @transform_6, window_bounds = array<i64: 8, 72>}, {transform_indices = @transform_7, window_bounds = array<i64: 1, 4, 1024>}]} {
    %c0 = arith.constant 0 : index
    %c0_0 = arith.constant 0 : index
    %0 = vector.load %arg3[%c0, %c0_0] : memref<25x1024xf32, #tpu.memory_space<vmem>>, vector<25x1024xf32>
    %c0_1 = arith.constant 0 : index
    %c0_2 = arith.constant 0 : index
    %c0_3 = arith.constant 0 : index
    %1 = vector.load %arg2[%c0_1, %c0_2, %c0_3] : memref<1x8x1024xf32, #tpu.memory_space<vmem>>, vector<1x8x1024xf32>
    %2 = vector.shape_cast %1 : vector<1x8x1024xf32> to vector<8x1024xf32>
    %c136_i32 = arith.constant 136 : i32
    %3 = tpu.dynamic_rotate %2 by %c136_i32 dim 1 : vector<8x1024xf32>, i32 -> vector<8x1024xf32>
    %4 = vector.extract_strided_slice %0 {offsets = [0, 0], sizes = [1, 1024], strides = [1, 1]} : vector<25x1024xf32> to vector<1x1024xf32>
    %5 = vector.broadcast %4 : vector<1x1024xf32> to vector<8x1024xf32>
    %6 = arith.mulf %3, %5 : vector<8x1024xf32>
    %c132_i32 = arith.constant 132 : i32
    %7 = tpu.dynamic_rotate %2 by %c132_i32 dim 1 : vector<8x1024xf32>, i32 -> vector<8x1024xf32>
    %8 = vector.extract_strided_slice %0 {offsets = [1, 0], sizes = [1, 1024], strides = [1, 1]} : vector<25x1024xf32> to vector<1x1024xf32>
    %9 = vector.broadcast %8 : vector<1x1024xf32> to vector<8x1024xf32>
    %10 = arith.mulf %7, %9 : vector<8x1024xf32>
    %c128_i32 = arith.constant 128 : i32
    %11 = tpu.dynamic_rotate %2 by %c128_i32 dim 1 : vector<8x1024xf32>, i32 -> vector<8x1024xf32>
    %12 = vector.extract_strided_slice %0 {offsets = [2, 0], sizes = [1, 1024], strides = [1, 1]} : vector<25x1024xf32> to vector<1x1024xf32>
    %13 = vector.broadcast %12 : vector<1x1024xf32> to vector<8x1024xf32>
    %14 = arith.mulf %11, %13 : vector<8x1024xf32>
    %c120_i32 = arith.constant 120 : i32
    %15 = tpu.dynamic_rotate %2 by %c120_i32 dim 1 : vector<8x1024xf32>, i32 -> vector<8x1024xf32>
    %16 = vector.extract_strided_slice %0 {offsets = [3, 0], sizes = [1, 1024], strides = [1, 1]} : vector<25x1024xf32> to vector<1x1024xf32>
    %17 = vector.broadcast %16 : vector<1x1024xf32> to vector<8x1024xf32>
    %18 = arith.mulf %15, %17 : vector<8x1024xf32>
    %c72_i32 = arith.constant 72 : i32
    %19 = tpu.dynamic_rotate %2 by %c72_i32 dim 1 : vector<8x1024xf32>, i32 -> vector<8x1024xf32>
    %20 = vector.extract_strided_slice %0 {offsets = [4, 0], sizes = [1, 1024], strides = [1, 1]} : vector<25x1024xf32> to vector<1x1024xf32>
    %21 = vector.broadcast %20 : vector<1x1024xf32> to vector<8x1024xf32>
    %22 = arith.mulf %19, %21 : vector<8x1024xf32>
    %c68_i32 = arith.constant 68 : i32
    %23 = tpu.dynamic_rotate %2 by %c68_i32 dim 1 : vector<8x1024xf32>, i32 -> vector<8x1024xf32>
    %24 = vector.extract_strided_slice %0 {offsets = [5, 0], sizes = [1, 1024], strides = [1, 1]} : vector<25x1024xf32> to vector<1x1024xf32>
    %25 = vector.broadcast %24 : vector<1x1024xf32> to vector<8x1024xf32>
    %26 = arith.mulf %23, %25 : vector<8x1024xf32>
    %c64_i32 = arith.constant 64 : i32
    %27 = tpu.dynamic_rotate %2 by %c64_i32 dim 1 : vector<8x1024xf32>, i32 -> vector<8x1024xf32>
    %28 = vector.extract_strided_slice %0 {offsets = [6, 0], sizes = [1, 1024], strides = [1, 1]} : vector<25x1024xf32> to vector<1x1024xf32>
    %29 = vector.broadcast %28 : vector<1x1024xf32> to vector<8x1024xf32>
    %30 = arith.mulf %27, %29 : vector<8x1024xf32>
    %c56_i32 = arith.constant 56 : i32
    %31 = tpu.dynamic_rotate %2 by %c56_i32 dim 1 : vector<8x1024xf32>, i32 -> vector<8x1024xf32>
    %32 = vector.extract_strided_slice %0 {offsets = [7, 0], sizes = [1, 1024], strides = [1, 1]} : vector<25x1024xf32> to vector<1x1024xf32>
    %33 = vector.broadcast %32 : vector<1x1024xf32> to vector<8x1024xf32>
    %34 = arith.mulf %31, %33 : vector<8x1024xf32>
    %c8_i32 = arith.constant 8 : i32
    %35 = tpu.dynamic_rotate %2 by %c8_i32 dim 1 : vector<8x1024xf32>, i32 -> vector<8x1024xf32>
    %36 = vector.extract_strided_slice %0 {offsets = [8, 0], sizes = [1, 1024], strides = [1, 1]} : vector<25x1024xf32> to vector<1x1024xf32>
    %37 = vector.broadcast %36 : vector<1x1024xf32> to vector<8x1024xf32>
    %38 = arith.mulf %35, %37 : vector<8x1024xf32>
    %c4_i32 = arith.constant 4 : i32
    %39 = tpu.dynamic_rotate %2 by %c4_i32 dim 1 : vector<8x1024xf32>, i32 -> vector<8x1024xf32>
    %40 = vector.extract_strided_slice %0 {offsets = [9, 0], sizes = [1, 1024], strides = [1, 1]} : vector<25x1024xf32> to vector<1x1024xf32>
    %41 = vector.broadcast %40 : vector<1x1024xf32> to vector<8x1024xf32>
    %42 = arith.mulf %39, %41 : vector<8x1024xf32>
    %43 = vector.extract_strided_slice %0 {offsets = [10, 0], sizes = [1, 1024], strides = [1, 1]} : vector<25x1024xf32> to vector<1x1024xf32>
    %44 = vector.broadcast %43 : vector<1x1024xf32> to vector<8x1024xf32>
    %45 = arith.mulf %2, %44 : vector<8x1024xf32>
    %c1016_i32 = arith.constant 1016 : i32
    %46 = tpu.dynamic_rotate %2 by %c1016_i32 dim 1 : vector<8x1024xf32>, i32 -> vector<8x1024xf32>
    %47 = vector.extract_strided_slice %0 {offsets = [11, 0], sizes = [1, 1024], strides = [1, 1]} : vector<25x1024xf32> to vector<1x1024xf32>
    %48 = vector.broadcast %47 : vector<1x1024xf32> to vector<8x1024xf32>
    %49 = arith.mulf %46, %48 : vector<8x1024xf32>
    %c904_i32 = arith.constant 904 : i32
    %50 = tpu.dynamic_rotate %2 by %c904_i32 dim 1 : vector<8x1024xf32>, i32 -> vector<8x1024xf32>
    %51 = vector.extract_strided_slice %0 {offsets = [12, 0], sizes = [1, 1024], strides = [1, 1]} : vector<25x1024xf32> to vector<1x1024xf32>
    %52 = vector.broadcast %51 : vector<1x1024xf32> to vector<8x1024xf32>
    %53 = arith.mulf %50, %52 : vector<8x1024xf32>
    %c900_i32 = arith.constant 900 : i32
    %54 = tpu.dynamic_rotate %2 by %c900_i32 dim 1 : vector<8x1024xf32>, i32 -> vector<8x1024xf32>
    %55 = vector.extract_strided_slice %0 {offsets = [13, 0], sizes = [1, 1024], strides = [1, 1]} : vector<25x1024xf32> to vector<1x1024xf32>
    %56 = vector.broadcast %55 : vector<1x1024xf32> to vector<8x1024xf32>
    %57 = arith.mulf %54, %56 : vector<8x1024xf32>
    %c896_i32 = arith.constant 896 : i32
    %58 = tpu.dynamic_rotate %2 by %c896_i32 dim 1 : vector<8x1024xf32>, i32 -> vector<8x1024xf32>
    %59 = vector.extract_strided_slice %0 {offsets = [14, 0], sizes = [1, 1024], strides = [1, 1]} : vector<25x1024xf32> to vector<1x1024xf32>
    %60 = vector.broadcast %59 : vector<1x1024xf32> to vector<8x1024xf32>
    %61 = arith.mulf %58, %60 : vector<8x1024xf32>
    %c888_i32 = arith.constant 888 : i32
    %62 = tpu.dynamic_rotate %2 by %c888_i32 dim 1 : vector<8x1024xf32>, i32 -> vector<8x1024xf32>
    %63 = vector.extract_strided_slice %0 {offsets = [15, 0], sizes = [1, 1024], strides = [1, 1]} : vector<25x1024xf32> to vector<1x1024xf32>
    %64 = vector.broadcast %63 : vector<1x1024xf32> to vector<8x1024xf32>
    %65 = arith.mulf %62, %64 : vector<8x1024xf32>
    %66 = tpu.concatenate %6, %10, %14, %18, %22, %26, %30, %34, %38, %42, %45, %49, %53, %57, %61, %65 in 0 : vector<8x1024xf32>, vector<8x1024xf32>, vector<8x1024xf32>, vector<8x1024xf32>, vector<8x1024xf32>, vector<8x1024xf32>, vector<8x1024xf32>, vector<8x1024xf32>, vector<8x1024xf32>, vector<8x1024xf32>, vector<8x1024xf32>, vector<8x1024xf32>, vector<8x1024xf32>, vector<8x1024xf32>, vector<8x1024xf32>, vector<8x1024xf32> -> vector<128x1024xf32>
    %67 = arith.truncf %66 : vector<128x1024xf32> to vector<128x1024xbf16>
    %c0_4 = arith.constant 0 : index
    %c0_5 = arith.constant 0 : index
    %68 = vector.load %arg4[%c0_4, %c0_5] : memref<4x128xbf16, #tpu.memory_space<vmem>>, vector<4x128xbf16>
    %cst = arith.constant dense<0.000000e+00> : vector<4x1024xf32>
    %69 = tpu.matmul %68, %67, %cst {dimension_numbers = #tpu.dot_dimension_numbers<[1], [0], [0], [1], [0, 0, 1, 1], [], []>} : vector<4x128xbf16>, vector<128x1024xbf16>, vector<4x1024xf32> -> vector<4x1024xf32>
    %c0_6 = arith.constant 0 : index
    %c0_7 = arith.constant 0 : index
    %70 = vector.load %arg5[%c0_6, %c0_7] : memref<4x1xf32, #tpu.memory_space<vmem>>, vector<4x1xf32>
    %71 = vector.broadcast %70 : vector<4x1xf32> to vector<4x1024xf32>
    %72 = arith.addf %69, %71 : vector<4x1024xf32>
    %c0_8 = arith.constant 0 : index
    %c0_9 = arith.constant 0 : index
    %c0_10 = arith.constant 0 : index
    %73 = vector.load %arg1[%c0_8, %c0_9, %c0_10] : memref<1x4x1024xf32, #tpu.memory_space<vmem>>, vector<1x4x1024xf32>
    %74 = vector.shape_cast %73 : vector<1x4x1024xf32> to vector<4x1024xf32>
    %75 = tpu.concatenate %74, %72 in 0 : vector<4x1024xf32>, vector<4x1024xf32> -> vector<8x1024xf32>
    %c68_i32_11 = arith.constant 68 : i32
    %76 = tpu.dynamic_rotate %75 by %c68_i32_11 dim 1 : vector<8x1024xf32>, i32 -> vector<8x1024xf32>
    %77 = vector.extract_strided_slice %0 {offsets = [16, 0], sizes = [1, 1024], strides = [1, 1]} : vector<25x1024xf32> to vector<1x1024xf32>
    %78 = vector.broadcast %77 : vector<1x1024xf32> to vector<8x1024xf32>
    %79 = arith.mulf %76, %78 : vector<8x1024xf32>
    %c64_i32_12 = arith.constant 64 : i32
    %80 = tpu.dynamic_rotate %75 by %c64_i32_12 dim 1 : vector<8x1024xf32>, i32 -> vector<8x1024xf32>
    %81 = vector.extract_strided_slice %0 {offsets = [17, 0], sizes = [1, 1024], strides = [1, 1]} : vector<25x1024xf32> to vector<1x1024xf32>
    %82 = vector.broadcast %81 : vector<1x1024xf32> to vector<8x1024xf32>
    %83 = arith.mulf %80, %82 : vector<8x1024xf32>
    %c60_i32 = arith.constant 60 : i32
    %84 = tpu.dynamic_rotate %75 by %c60_i32 dim 1 : vector<8x1024xf32>, i32 -> vector<8x1024xf32>
    %85 = vector.extract_strided_slice %0 {offsets = [18, 0], sizes = [1, 1024], strides = [1, 1]} : vector<25x1024xf32> to vector<1x1024xf32>
    %86 = vector.broadcast %85 : vector<1x1024xf32> to vector<8x1024xf32>
    %87 = arith.mulf %84, %86 : vector<8x1024xf32>
    %c4_i32_13 = arith.constant 4 : i32
    %88 = tpu.dynamic_rotate %75 by %c4_i32_13 dim 1 : vector<8x1024xf32>, i32 -> vector<8x1024xf32>
    %89 = vector.extract_strided_slice %0 {offsets = [19, 0], sizes = [1, 1024], strides = [1, 1]} : vector<25x1024xf32> to vector<1x1024xf32>
    %90 = vector.broadcast %89 : vector<1x1024xf32> to vector<8x1024xf32>
    %91 = arith.mulf %88, %90 : vector<8x1024xf32>
    %92 = vector.extract_strided_slice %0 {offsets = [20, 0], sizes = [1, 1024], strides = [1, 1]} : vector<25x1024xf32> to vector<1x1024xf32>
    %93 = vector.broadcast %92 : vector<1x1024xf32> to vector<8x1024xf32>
    %94 = arith.mulf %75, %93 : vector<8x1024xf32>
    %c1020_i32 = arith.constant 1020 : i32
    %95 = tpu.dynamic_rotate %75 by %c1020_i32 dim 1 : vector<8x1024xf32>, i32 -> vector<8x1024xf32>
    %96 = vector.extract_strided_slice %0 {offsets = [21, 0], sizes = [1, 1024], strides = [1, 1]} : vector<25x1024xf32> to vector<1x1024xf32>
    %97 = vector.broadcast %96 : vector<1x1024xf32> to vector<8x1024xf32>
    %98 = arith.mulf %95, %97 : vector<8x1024xf32>
    %c964_i32 = arith.constant 964 : i32
    %99 = tpu.dynamic_rotate %75 by %c964_i32 dim 1 : vector<8x1024xf32>, i32 -> vector<8x1024xf32>
    %100 = vector.extract_strided_slice %0 {offsets = [22, 0], sizes = [1, 1024], strides = [1, 1]} : vector<25x1024xf32> to vector<1x1024xf32>
    %101 = vector.broadcast %100 : vector<1x1024xf32> to vector<8x1024xf32>
    %102 = arith.mulf %99, %101 : vector<8x1024xf32>
    %c960_i32 = arith.constant 960 : i32
    %103 = tpu.dynamic_rotate %75 by %c960_i32 dim 1 : vector<8x1024xf32>, i32 -> vector<8x1024xf32>
    %104 = vector.extract_strided_slice %0 {offsets = [23, 0], sizes = [1, 1024], strides = [1, 1]} : vector<25x1024xf32> to vector<1x1024xf32>
    %105 = vector.broadcast %104 : vector<1x1024xf32> to vector<8x1024xf32>
    %106 = arith.mulf %103, %105 : vector<8x1024xf32>
    %c956_i32 = arith.constant 956 : i32
    %107 = tpu.dynamic_rotate %75 by %c956_i32 dim 1 : vector<8x1024xf32>, i32 -> vector<8x1024xf32>
    %108 = vector.extract_strided_slice %0 {offsets = [24, 0], sizes = [1, 1024], strides = [1, 1]} : vector<25x1024xf32> to vector<1x1024xf32>
    %109 = vector.broadcast %108 : vector<1x1024xf32> to vector<8x1024xf32>
    %110 = arith.mulf %107, %109 : vector<8x1024xf32>
    %111 = tpu.concatenate %79, %83, %87, %91, %94, %98, %102, %106, %110 in 0 : vector<8x1024xf32>, vector<8x1024xf32>, vector<8x1024xf32>, vector<8x1024xf32>, vector<8x1024xf32>, vector<8x1024xf32>, vector<8x1024xf32>, vector<8x1024xf32>, vector<8x1024xf32> -> vector<72x1024xf32>
    %112 = arith.truncf %111 : vector<72x1024xf32> to vector<72x1024xbf16>
    %c0_14 = arith.constant 0 : index
    %c0_15 = arith.constant 0 : index
    %113 = vector.load %arg6[%c0_14, %c0_15] : memref<8x72xbf16, #tpu.memory_space<vmem>>, vector<8x72xbf16>
    %cst_16 = arith.constant dense<0.000000e+00> : vector<8x1024xf32>
    %114 = tpu.matmul %113, %112, %cst_16 {dimension_numbers = #tpu.dot_dimension_numbers<[1], [0], [0], [1], [0, 0, 1, 1], [], []>} : vector<8x72xbf16>, vector<72x1024xbf16>, vector<8x1024xf32> -> vector<8x1024xf32>
    %cst_17 = arith.constant dense<0.000000e+00> : vector<8xf32>
    %115 = vector.multi_reduction <add>, %114, %cst_17 [1] : vector<8x1024xf32> to vector<8xf32>
    %116 = vector.shape_cast %115 : vector<8xf32> to vector<8x1xf32>
    %cst_18 = arith.constant 9.765625E-4 : f32
    %117 = vector.broadcast %cst_18 : f32 to vector<8x1xf32>
    %118 = arith.mulf %116, %117 : vector<8x1xf32>
    %119 = vector.broadcast %118 : vector<8x1xf32> to vector<8x1024xf32>
    %120 = arith.subf %114, %119 : vector<8x1024xf32>
    %121 = arith.mulf %120, %120 : vector<8x1024xf32>
    %cst_19 = arith.constant dense<0.000000e+00> : vector<8xf32>
    %122 = vector.multi_reduction <add>, %121, %cst_19 [1] : vector<8x1024xf32> to vector<8xf32>
    %123 = vector.shape_cast %122 : vector<8xf32> to vector<8x1xf32>
    %cst_20 = arith.constant 9.765625E-4 : f32
    %124 = vector.broadcast %cst_20 : f32 to vector<8x1xf32>
    %125 = arith.mulf %123, %124 : vector<8x1xf32>
    %cst_21 = arith.constant 9.99999974E-6 : f32
    %126 = vector.broadcast %cst_21 : f32 to vector<8x1xf32>
    %127 = arith.addf %125, %126 : vector<8x1xf32>
    %128 = math.rsqrt %127 : vector<8x1xf32>
    %129 = vector.broadcast %128 : vector<8x1xf32> to vector<8x1024xf32>
    %130 = arith.mulf %120, %129 : vector<8x1024xf32>
    %cst_22 = arith.constant 0.000000e+00 : f32
    %131 = vector.broadcast %cst_22 : f32 to vector<8x1024xf32>
    %132 = arith.maximumf %130, %131 : vector<8x1024xf32>
    %c68_i32_23 = arith.constant 68 : i32
    %133 = tpu.dynamic_rotate %132 by %c68_i32_23 dim 1 : vector<8x1024xf32>, i32 -> vector<8x1024xf32>
    %134 = vector.extract_strided_slice %0 {offsets = [16, 0], sizes = [1, 1024], strides = [1, 1]} : vector<25x1024xf32> to vector<1x1024xf32>
    %135 = vector.broadcast %134 : vector<1x1024xf32> to vector<8x1024xf32>
    %136 = arith.mulf %133, %135 : vector<8x1024xf32>
    %c64_i32_24 = arith.constant 64 : i32
    %137 = tpu.dynamic_rotate %132 by %c64_i32_24 dim 1 : vector<8x1024xf32>, i32 -> vector<8x1024xf32>
    %138 = vector.extract_strided_slice %0 {offsets = [17, 0], sizes = [1, 1024], strides = [1, 1]} : vector<25x1024xf32> to vector<1x1024xf32>
    %139 = vector.broadcast %138 : vector<1x1024xf32> to vector<8x1024xf32>
    %140 = arith.mulf %137, %139 : vector<8x1024xf32>
    %c60_i32_25 = arith.constant 60 : i32
    %141 = tpu.dynamic_rotate %132 by %c60_i32_25 dim 1 : vector<8x1024xf32>, i32 -> vector<8x1024xf32>
    %142 = vector.extract_strided_slice %0 {offsets = [18, 0], sizes = [1, 1024], strides = [1, 1]} : vector<25x1024xf32> to vector<1x1024xf32>
    %143 = vector.broadcast %142 : vector<1x1024xf32> to vector<8x1024xf32>
    %144 = arith.mulf %141, %143 : vector<8x1024xf32>
    %c4_i32_26 = arith.constant 4 : i32
    %145 = tpu.dynamic_rotate %132 by %c4_i32_26 dim 1 : vector<8x1024xf32>, i32 -> vector<8x1024xf32>
    %146 = vector.extract_strided_slice %0 {offsets = [19, 0], sizes = [1, 1024], strides = [1, 1]} : vector<25x1024xf32> to vector<1x1024xf32>
    %147 = vector.broadcast %146 : vector<1x1024xf32> to vector<8x1024xf32>
    %148 = arith.mulf %145, %147 : vector<8x1024xf32>
    %149 = vector.extract_strided_slice %0 {offsets = [20, 0], sizes = [1, 1024], strides = [1, 1]} : vector<25x1024xf32> to vector<1x1024xf32>
    %150 = vector.broadcast %149 : vector<1x1024xf32> to vector<8x1024xf32>
    %151 = arith.mulf %132, %150 : vector<8x1024xf32>
    %c1020_i32_27 = arith.constant 1020 : i32
    %152 = tpu.dynamic_rotate %132 by %c1020_i32_27 dim 1 : vector<8x1024xf32>, i32 -> vector<8x1024xf32>
    %153 = vector.extract_strided_slice %0 {offsets = [21, 0], sizes = [1, 1024], strides = [1, 1]} : vector<25x1024xf32> to vector<1x1024xf32>
    %154 = vector.broadcast %153 : vector<1x1024xf32> to vector<8x1024xf32>
    %155 = arith.mulf %152, %154 : vector<8x1024xf32>
    %c964_i32_28 = arith.constant 964 : i32
    %156 = tpu.dynamic_rotate %132 by %c964_i32_28 dim 1 : vector<8x1024xf32>, i32 -> vector<8x1024xf32>
    %157 = vector.extract_strided_slice %0 {offsets = [22, 0], sizes = [1, 1024], strides = [1, 1]} : vector<25x1024xf32> to vector<1x1024xf32>
    %158 = vector.broadcast %157 : vector<1x1024xf32> to vector<8x1024xf32>
    %159 = arith.mulf %156, %158 : vector<8x1024xf32>
    %c960_i32_29 = arith.constant 960 : i32
    %160 = tpu.dynamic_rotate %132 by %c960_i32_29 dim 1 : vector<8x1024xf32>, i32 -> vector<8x1024xf32>
    %161 = vector.extract_strided_slice %0 {offsets = [23, 0], sizes = [1, 1024], strides = [1, 1]} : vector<25x1024xf32> to vector<1x1024xf32>
    %162 = vector.broadcast %161 : vector<1x1024xf32> to vector<8x1024xf32>
    %163 = arith.mulf %160, %162 : vector<8x1024xf32>
    %c956_i32_30 = arith.constant 956 : i32
    %164 = tpu.dynamic_rotate %132 by %c956_i32_30 dim 1 : vector<8x1024xf32>, i32 -> vector<8x1024xf32>
    %165 = vector.extract_strided_slice %0 {offsets = [24, 0], sizes = [1, 1024], strides = [1, 1]} : vector<25x1024xf32> to vector<1x1024xf32>
    %166 = vector.broadcast %165 : vector<1x1024xf32> to vector<8x1024xf32>
    %167 = arith.mulf %164, %166 : vector<8x1024xf32>
    %168 = tpu.concatenate %136, %140, %144, %148, %151, %155, %159, %163, %167 in 0 : vector<8x1024xf32>, vector<8x1024xf32>, vector<8x1024xf32>, vector<8x1024xf32>, vector<8x1024xf32>, vector<8x1024xf32>, vector<8x1024xf32>, vector<8x1024xf32>, vector<8x1024xf32> -> vector<72x1024xf32>
    %169 = arith.truncf %168 : vector<72x1024xf32> to vector<72x1024xbf16>
    %c0_31 = arith.constant 0 : index
    %c0_32 = arith.constant 0 : index
    %170 = vector.load %arg7[%c0_31, %c0_32] : memref<8x72xbf16, #tpu.memory_space<vmem>>, vector<8x72xbf16>
    %cst_33 = arith.constant dense<0.000000e+00> : vector<8x1024xf32>
    %171 = tpu.matmul %170, %169, %cst_33 {dimension_numbers = #tpu.dot_dimension_numbers<[1], [0], [0], [1], [0, 0, 1, 1], [], []>} : vector<8x72xbf16>, vector<72x1024xbf16>, vector<8x1024xf32> -> vector<8x1024xf32>
    %cst_34 = arith.constant dense<0.000000e+00> : vector<8xf32>
    %172 = vector.multi_reduction <add>, %171, %cst_34 [1] : vector<8x1024xf32> to vector<8xf32>
    %173 = vector.shape_cast %172 : vector<8xf32> to vector<8x1xf32>
    %cst_35 = arith.constant 9.765625E-4 : f32
    %174 = vector.broadcast %cst_35 : f32 to vector<8x1xf32>
    %175 = arith.mulf %173, %174 : vector<8x1xf32>
    %176 = vector.broadcast %175 : vector<8x1xf32> to vector<8x1024xf32>
    %177 = arith.subf %171, %176 : vector<8x1024xf32>
    %178 = arith.mulf %177, %177 : vector<8x1024xf32>
    %cst_36 = arith.constant dense<0.000000e+00> : vector<8xf32>
    %179 = vector.multi_reduction <add>, %178, %cst_36 [1] : vector<8x1024xf32> to vector<8xf32>
    %180 = vector.shape_cast %179 : vector<8xf32> to vector<8x1xf32>
    %cst_37 = arith.constant 9.765625E-4 : f32
    %181 = vector.broadcast %cst_37 : f32 to vector<8x1xf32>
    %182 = arith.mulf %180, %181 : vector<8x1xf32>
    %cst_38 = arith.constant 9.99999974E-6 : f32
    %183 = vector.broadcast %cst_38 : f32 to vector<8x1xf32>
    %184 = arith.addf %182, %183 : vector<8x1xf32>
    %185 = math.rsqrt %184 : vector<8x1xf32>
    %186 = vector.broadcast %185 : vector<8x1xf32> to vector<8x1024xf32>
    %187 = arith.mulf %177, %186 : vector<8x1024xf32>
    %cst_39 = arith.constant 0.000000e+00 : f32
    %188 = vector.broadcast %cst_39 : f32 to vector<8x1024xf32>
    %189 = arith.maximumf %187, %188 : vector<8x1024xf32>
    %190 = vector.extract_strided_slice %189 {offsets = [0, 0], sizes = [4, 1024], strides = [1, 1]} : vector<8x1024xf32> to vector<4x1024xf32>
    %c0_40 = arith.constant 0 : index
    %c0_41 = arith.constant 0 : index
    %c0_42 = arith.constant 0 : index
    %191 = vector.load %arg8[%c0_40, %c0_41, %c0_42] : memref<1x4x1024xf32, #tpu.memory_space<vmem>>, vector<1x4x1024xf32>
    %192 = vector.shape_cast %191 : vector<1x4x1024xf32> to vector<4x1024xf32>
    %193 = vector.shape_cast %190 : vector<4x1024xf32> to vector<1x4x1024xf32>
    tpu.vector_store %arg8[%c0_40, %c0_41, %c0_42], %193 {strides = array<i32>} : memref<1x4x1024xf32, #tpu.memory_space<vmem>>, vector<1x4x1024xf32>,
    return
  }
  func.func @transform_0(%arg0: i32) -> (i32, i32, i32) {
    %c0_i32 = arith.constant 0 : i32
    %c0_i32_0 = arith.constant 0 : i32
    %c0_i32_1 = arith.constant 0 : i32
    return %arg0, %c0_i32, %c0_i32_0 : i32, i32, i32
  }
  func.func @transform_1(%arg0: i32) -> (i32, i32, i32) {
    %c0_i32 = arith.constant 0 : i32
    %c0_i32_0 = arith.constant 0 : i32
    %c0_i32_1 = arith.constant 0 : i32
    return %arg0, %c0_i32, %c0_i32_0 : i32, i32, i32
  }
  func.func @transform_2(%arg0: i32) -> (i32, i32) {
    %c0_i32 = arith.constant 0 : i32
    %c0_i32_0 = arith.constant 0 : i32
    %c0_i32_1 = arith.constant 0 : i32
    return %c0_i32, %c0_i32_0 : i32, i32
  }
  func.func @transform_3(%arg0: i32) -> (i32, i32) {
    %c0_i32 = arith.constant 0 : i32
    %c0_i32_0 = arith.constant 0 : i32
    %c0_i32_1 = arith.constant 0 : i32
    return %c0_i32, %c0_i32_0 : i32, i32
  }
  func.func @transform_4(%arg0: i32) -> (i32, i32) {
    %c0_i32 = arith.constant 0 : i32
    %c0_i32_0 = arith.constant 0 : i32
    %c0_i32_1 = arith.constant 0 : i32
    return %c0_i32, %c0_i32_0 : i32, i32
  }
  func.func @transform_5(%arg0: i32) -> (i32, i32) {
    %c0_i32 = arith.constant 0 : i32
    %c0_i32_0 = arith.constant 0 : i32
    %c0_i32_1 = arith.constant 0 : i32
    return %c0_i32, %c0_i32_0 : i32, i32
  }
  func.func @transform_6(%arg0: i32) -> (i32, i32) {
    %c0_i32 = arith.constant 0 : i32
    %c0_i32_0 = arith.constant 0 : i32
    %c0_i32_1 = arith.constant 0 : i32
    return %c0_i32, %c0_i32_0 : i32, i32
  }
  func.func @transform_7(%arg0: i32) -> (i32, i32, i32) {
    %c0_i32 = arith.constant 0 : i32
    %c0_i32_0 = arith.constant 0 : i32
    %c0_i32_1 = arith.constant 0 : i32
    return %arg0, %c0_i32, %c0_i32_0 : i32, i32, i32
  }
}

</mosaic_0001>

<llo_original>
// kernel: unet_up3_forward.1
$region0: #{unet_up3_forward.1}
  #allocation0 [shape = 'u32[]', space=smem, size = 0x4, offset = 0x4, fixed_abs, tag = 'smem constant byte address 0x4 - core index']
  #allocation1 [shape = 'u32[72,128]{1,0:T(1,128)}', space=vmem, size = 0x9000, scoped, tag = 'internal scratch']
  %s0 = inlined_call_operand.vmem [shape: f32[2,4,1024], index: 0, kind: input, shape index: {}]
  %s1 = inlined_call_operand.vmem [shape: f32[2,8,1024], index: 1, kind: input, shape index: {}]
  %s2 = inlined_call_operand.vmem [shape: f32[25,1024], index: 2, kind: input, shape index: {}]
  %s3 = inlined_call_operand.vmem [shape: bf16[4,128], index: 3, kind: input, shape index: {}]
  %s4 = inlined_call_operand.vmem [shape: f32[4,1], index: 4, kind: input, shape index: {}]
  %s5 = inlined_call_operand.vmem [shape: bf16[8,72], index: 5, kind: input, shape index: {}]
  %s6 = inlined_call_operand.vmem [shape: bf16[8,72], index: 6, kind: input, shape index: {}]
  %s7 = inlined_call_operand.vmem [shape: f32[2,4,1024], index: 7, kind: output, shape index: {}]
  %s8 = sld [smem:[#allocation0]]
  $region61: #{unet_up3_forward.1} parent=0
    _
  %s10 = ssub.s32 1, %s8
  %s11 = scalar_select 0, %s10, %s8
  loop: start=0, step=1, limit=4
  $region2: #{unet_up3_forward.1} parent=0 // loop_pre_header
    _
  $region3: #{unet_up3_forward.1} parent=0 // loop_header
    %s13 = sphi 0, %s17
    %p14 = scmp.ge.s32.totalorder %s13, 4
    %s23 = sphi 0, %s25
    %s26 = sphi 0, %s23
    %s27 = sphi 0, %s26
    %s43 = sphi 0, %s27
    %s49 = sphi 0, %s51
    %s52 = sphi 0, %s49
    %s53 = sphi 0, %s52
    %s69 = sphi 0, %s53
    %s73 = sphi 0, %s73
    %s75 = sphi 0, %s73
    %s76 = sphi 0, %s75
    %s90 = sphi 0, %s76
    %s94 = sphi 0, %s94
    %s96 = sphi 0, %s94
    %s97 = sphi 0, %s96
    %s111 = sphi 0, %s97
    %s115 = sphi 0, %s115
    %s117 = sphi 0, %s115
    %s118 = sphi 0, %s117
    %s132 = sphi 0, %s118
    %s136 = sphi 0, %s136
    %s138 = sphi 0, %s136
    %s139 = sphi 0, %s138
    %s153 = sphi 0, %s139
    %s157 = sphi 0, %s157
    %s159 = sphi 0, %s157
    %s160 = sphi 0, %s159
    %s174 = sphi 0, %s160
    %s180 = sphi 0, %s182
    %s183 = sphi 0, %s180
    %s184 = sphi 0, %s183
    %s200 = sphi 0, %s184
  $region4: #{unet_up3_forward.1} parent=0 // loop_header_branch
    %16 = sbr.rel (%p14) target = $region8
  $region5: #{unet_up3_forward.1} parent=0 // loop_body
    %s18 = ssub.s32 %s13, 1
    %s19 = ssub.s32 %s13, 2
    %s20 = sadd.s32 %s13, 1
    %s21 = ssub.s32 %s13, %s20
    %p22 = scmp.eq.s32.totalorder %s21, 0
    %s24 = sadd.s32 %s23, 1
    %s25 = scalar_select %p22, %s23, %s24
    %p28 = pneg %p22
    %p29 = scmp.eq.s32.totalorder %s13, 1
    %p30 = por %p28, %p29
    %p31 = scmp.ne.s32.totalorder %s23, %s26
    %p32 = scmp.eq.s32.totalorder %s13, 0
    %p33 = por %p31, %p32
    %p34 = scmp.ne.s32.totalorder %s23, %s26
    %p35 = scmp.eq.s32.totalorder %s18, 1
    %p36 = por %p34, %p35
    %p37 = scmp.ne.s32.totalorder %s26, %s27
    %p38 = scmp.eq.s32.totalorder %s18, 0
    %p39 = por %p37, %p38
    %p40 = scmp.ne.s32.totalorder %s26, %s27
    %p41 = scmp.eq.s32.totalorder %s19, 1
    %p42 = por %p40, %p41
    %p44 = scmp.ne.s32.totalorder %s27, %s43
    %p45 = scmp.eq.s32.totalorder %s19, 0
    %p46 = por %p44, %p45
    %s47 = ssub.s32 %s13, %s20
    %p48 = scmp.eq.s32.totalorder %s47, 0
    %s50 = sadd.s32 %s49, 1
    %s51 = scalar_select %p48, %s49, %s50
    %p54 = pneg %p48
    %p55 = scmp.eq.s32.totalorder %s13, 1
    %p56 = por %p54, %p55
    %p57 = scmp.ne.s32.totalorder %s49, %s52
    %p58 = scmp.eq.s32.totalorder %s13, 0
    %p59 = por %p57, %p58
    %p60 = scmp.ne.s32.totalorder %s49, %s52
    %p61 = scmp.eq.s32.totalorder %s18, 1
    %p62 = por %p60, %p61
    %p63 = scmp.ne.s32.totalorder %s52, %s53
    %p64 = scmp.eq.s32.totalorder %s18, 0
    %p65 = por %p63, %p64
    %p66 = scmp.ne.s32.totalorder %s52, %s53
    %p67 = scmp.eq.s32.totalorder %s19, 1
    %p68 = por %p66, %p67
    %p70 = scmp.ne.s32.totalorder %s53, %s69
    %p71 = scmp.eq.s32.totalorder %s19, 0
    %p72 = por %p70, %p71
    %s74 = sadd.s32 %s73, 1
    %p77 = scmp.eq.s32.totalorder %s13, 1
    %p78 = scmp.ne.s32.totalorder %s73, %s75
    %p79 = scmp.eq.s32.totalorder %s13, 0
    %p80 = por %p78, %p79
    %p81 = scmp.ne.s32.totalorder %s73, %s75
    %p82 = scmp.eq.s32.totalorder %s18, 1
    %p83 = por %p81, %p82
    %p84 = scmp.ne.s32.totalorder %s75, %s76
    %p85 = scmp.eq.s32.totalorder %s18, 0
    %p86 = por %p84, %p85
    %p87 = scmp.ne.s32.totalorder %s75, %s76
    %p88 = scmp.eq.s32.totalorder %s19, 1
    %p89 = por %p87, %p88
    %p91 = scmp.ne.s32.totalorder %s76, %s90
    %p92 = scmp.eq.s32.totalorder %s19, 0
    %p93 = por %p91, %p92
    %s95 = sadd.s32 %s94, 1
    %p98 = scmp.eq.s32.totalorder %s13, 1
    %p99 = scmp.ne.s32.totalorder %s94, %s96
    %p100 = scmp.eq.s32.totalorder %s13, 0
    %p101 = por %p99, %p100
    %p102 = scmp.ne.s32.totalorder %s94, %s96
    %p103 = scmp.eq.s32.totalorder %s18, 1
    %p104 = por %p102, %p103
    %p105 = scmp.ne.s32.totalorder %s96, %s97
    %p106 = scmp.eq.s32.totalorder %s18, 0
    %p107 = por %p105, %p106
    %p108 = scmp.ne.s32.totalorder %s96, %s97
    %p109 = scmp.eq.s32.totalorder %s19, 1
    %p110 = por %p108, %p109
    %p112 = scmp.ne.s32.totalorder %s97, %s111
    %p113 = scmp.eq.s32.totalorder %s19, 0
    %p114 = por %p112, %p113
    %s116 = sadd.s32 %s115, 1
    %p119 = scmp.eq.s32.totalorder %s13, 1
    %p120 = scmp.ne.s32.totalorder %s115, %s117
    %p121 = scmp.eq.s32.totalorder %s13, 0
    %p122 = por %p120, %p121
    %p123 = scmp.ne.s32.totalorder %s115, %s117
    %p124 = scmp.eq.s32.totalorder %s18, 1
    %p125 = por %p123, %p124
    %p126 = scmp.ne.s32.totalorder %s117, %s118
    %p127 = scmp.eq.s32.totalorder %s18, 0
    %p128 = por %p126, %p127
    %p129 = scmp.ne.s32.totalorder %s117, %s118
    %p130 = scmp.eq.s32.totalorder %s19, 1
    %p131 = por %p129, %p130
    %p133 = scmp.ne.s32.totalorder %s118, %s132
    %p134 = scmp.eq.s32.totalorder %s19, 0
    %p135 = por %p133, %p134
    %s137 = sadd.s32 %s136, 1
    %p140 = scmp.eq.s32.totalorder %s13, 1
    %p141 = scmp.ne.s32.totalorder %s136, %s138
    %p142 = scmp.eq.s32.totalorder %s13, 0
    %p143 = por %p141, %p142
    %p144 = scmp.ne.s32.totalorder %s136, %s138
    %p145 = scmp.eq.s32.totalorder %s18, 1
    %p146 = por %p144, %p145
    %p147 = scmp.ne.s32.totalorder %s138, %s139
    %p148 = scmp.eq.s32.totalorder %s18, 0
    %p149 = por %p147, %p148
    %p150 = scmp.ne.s32.totalorder %s138, %s139
    %p151 = scmp.eq.s32.totalorder %s19, 1
    %p152 = por %p150, %p151
    %p154 = scmp.ne.s32.totalorder %s139, %s153
    %p155 = scmp.eq.s32.totalorder %s19, 0
    %p156 = por %p154, %p155
    %s158 = sadd.s32 %s157, 1
    %p161 = scmp.eq.s32.totalorder %s13, 1
    %p162 = scmp.ne.s32.totalorder %s157, %s159
    %p163 = scmp.eq.s32.totalorder %s13, 0
    %p164 = por %p162, %p163
    %p165 = scmp.ne.s32.totalorder %s157, %s159
    %p166 = scmp.eq.s32.totalorder %s18, 1
    %p167 = por %p165, %p166
    %p168 = scmp.ne.s32.totalorder %s159, %s160
    %p169 = scmp.eq.s32.totalorder %s18, 0
    %p170 = por %p168, %p169
    %p171 = scmp.ne.s32.totalorder %s159, %s160
    %p172 = scmp.eq.s32.totalorder %s19, 1
    %p173 = por %p171, %p172
    %p175 = scmp.ne.s32.totalorder %s160, %s174
    %p176 = scmp.eq.s32.totalorder %s19, 0
    %p177 = por %p175, %p176
    %s178 = ssub.s32 %s13, %s20
    %p179 = scmp.eq.s32.totalorder %s178, 0
    %s181 = sadd.s32 %s180, 1
    %s182 = scalar_select %p179, %s180, %s181
    %p185 = pneg %p179
    %p186 = scmp.eq.s32.totalorder %s13, 1
    %p187 = por %p185, %p186
    %p188 = scmp.ne.s32.totalorder %s180, %s183
    %p189 = scmp.eq.s32.totalorder %s13, 0
    %p190 = por %p188, %p189
    %p191 = scmp.ne.s32.totalorder %s180, %s183
    %p192 = scmp.eq.s32.totalorder %s18, 1
    %p193 = por %p191, %p192
    %p194 = scmp.ne.s32.totalorder %s183, %s184
    %p195 = scmp.eq.s32.totalorder %s18, 0
    %p196 = por %p194, %p195
    %p197 = scmp.ne.s32.totalorder %s183, %s184
    %p198 = scmp.eq.s32.totalorder %s19, 1
    %p199 = por %p197, %p198
    %p201 = scmp.ne.s32.totalorder %s184, %s200
    %p202 = scmp.eq.s32.totalorder %s19, 0
    %p203 = por %p201, %p202
    %p204 = scmp.le.s32.totalorder 1, %s13
    %p205 = scmp.lt.s32.totalorder %s13, 3
    %p206 = pnand %p204, %p205
    %p207 = pneg %p206
    // Predicated region
    $region9: #{unet_up3_forward.1} parent=5 // pred_check
      _
    $region10: #{unet_up3_forward.1} parent=5 // pred_check_branch
      %209 = sbr.rel (%p206) target = $region12
    $region11: #{unet_up3_forward.1} parent=5 // pred_region
      %s210 = ssub.s32 %s13, 1
      // Predicated region
      $region13: #{unet_up3_forward.1} parent=11 // pred_check
        %p211 = pneg %p86
      $region14: #{unet_up3_forward.1} parent=11 // pred_check_branch
        %213 = sbr.rel (%p211) target = $region16
      $region15: #{unet_up3_forward.1} parent=11 // pred_region
        _
      $region16: #{unet_up3_forward.1} parent=11 // pred_fallthru
        _
      // Predicated region
      $region17: #{unet_up3_forward.1} parent=11 // pred_check
        %p214 = pneg %p107
      $region18: #{unet_up3_forward.1} parent=11 // pred_check_branch
        %216 = sbr.rel (%p214) target = $region20
      $region19: #{unet_up3_forward.1} parent=11 // pred_region
        _
      $region20: #{unet_up3_forward.1} parent=11 // pred_fallthru
        _
      // Predicated region
      $region21: #{unet_up3_forward.1} parent=11 // pred_check
        %p217 = pneg %p128
      $region22: #{unet_up3_forward.1} parent=11 // pred_check_branch
        %219 = sbr.rel (%p217) target = $region24
      $region23: #{unet_up3_forward.1} parent=11 // pred_region
        _
      $region24: #{unet_up3_forward.1} parent=11 // pred_fallthru
        _
      // Predicated region
      $region25: #{unet_up3_forward.1} parent=11 // pred_check
        %p220 = pneg %p149
      $region26: #{unet_up3_forward.1} parent=11 // pred_check_branch
        %222 = sbr.rel (%p220) target = $region28
      $region27: #{unet_up3_forward.1} parent=11 // pred_region
        _
      $region28: #{unet_up3_forward.1} parent=11 // pred_fallthru
        _
      // Predicated region
      $region29: #{unet_up3_forward.1} parent=11 // pred_check
        %p223 = pneg %p170
      $region30: #{unet_up3_forward.1} parent=11 // pred_check_branch
        %225 = sbr.rel (%p223) target = $region32
      $region31: #{unet_up3_forward.1} parent=11 // pred_region
        _
      $region32: #{unet_up3_forward.1} parent=11 // pred_fallthru
        _
    $region12: #{unet_up3_forward.1} parent=5 // pred_fallthru
      _
    %p226 = scmp.lt.s32.totalorder %s13, 2
    // Predicated region
    $region33: #{unet_up3_forward.1} parent=5 // pred_check
      %p227 = pneg %p226
    $region34: #{unet_up3_forward.1} parent=5 // pred_check_branch
      %229 = sbr.rel (%p227) target = $region36
    $region35: #{unet_up3_forward.1} parent=5 // pred_region
      // Predicated region
      $region37: #{unet_up3_forward.1} parent=35 // pred_check
        %p230 = pneg %p33
      $region38: #{unet_up3_forward.1} parent=35 // pred_check_branch
        %232 = sbr.rel (%p230) target = $region40
      $region39: #{unet_up3_forward.1} parent=35 // pred_region
        %p233 = scmp.lt.s32.totalorder %s13, 1
        %s234 = scalar_select %p233, %s13, 1
        %s235 = smul.addr %s234, 8
        %s236 = smul.addr %s235, 4
        %s237 = scalar_lea.vmem %s0, %s236
      $region40: #{unet_up3_forward.1} parent=35 // pred_fallthru
        _
      // Predicated region
      $region41: #{unet_up3_forward.1} parent=35 // pred_check
        %p238 = pneg %p59
      $region42: #{unet_up3_forward.1} parent=35 // pred_check_branch
        %240 = sbr.rel (%p238) target = $region44
      $region43: #{unet_up3_forward.1} parent=35 // pred_region
        %p241 = scmp.lt.s32.totalorder %s13, 1
        %s242 = scalar_select %p241, %s13, 1
        %s243 = smul.addr %s242, 8
        %s244 = smul.addr %s243, 8
        %s245 = scalar_lea.vmem %s1, %s244
      $region44: #{unet_up3_forward.1} parent=35 // pred_fallthru
        _
    $region36: #{unet_up3_forward.1} parent=5 // pred_fallthru
      _
    %p246 = scmp.le.s32.totalorder 1, %s13
    %p247 = scmp.lt.s32.totalorder %s13, 3
    %p248 = pnand %p246, %p247
    %p249 = pneg %p248
    // Predicated region
    $region45: #{unet_up3_forward.1} parent=5 // pred_check
      _
    $region46: #{unet_up3_forward.1} parent=5 // pred_check_branch
      %251 = sbr.rel (%p248) target = $region48
    $region47: #{unet_up3_forward.1} parent=5 // pred_region
      %s252 = ssub.s32 %s13, 1
      %p253 = scmp.lt.s32.totalorder %s18, 1
      %s254 = scalar_select %p253, %s18, 1
      %s255 = smul.addr %s254, 8
      %s256 = smul.addr %s255, 4
      %s257 = scalar_lea.vmem %s0, %s256
      %p258 = pneg %p39
      %p259 = pneg %p36
      %p260 = scmp.lt.s32.totalorder %s18, 1
      %s261 = scalar_select %p260, %s18, 1
      %s262 = smul.addr %s261, 8
      %s263 = smul.addr %s262, 8
      %s264 = scalar_lea.vmem %s1, %s263
      %p265 = pneg %p65
      %p266 = pneg %p62
      %p267 = pneg %p86
      %p268 = pneg %p83
      %p269 = pneg %p107
      %p270 = pneg %p104
      %p271 = pneg %p128
      %p272 = pneg %p125
      %p273 = pneg %p149
      %p274 = pneg %p146
      %p275 = pneg %p170
      %p276 = pneg %p167
      %p277 = pneg %p196
      %p278 = pneg %p193
      %p279 = scmp.lt.s32.totalorder %s18, 1
      %s280 = scalar_select %p279, %s18, 1
      %s281 = smul.addr %s280, 8
      %s282 = smul.addr %s281, 4
      %s283 = scalar_lea.vmem %s7, %s282
      %p284 = scmp.lt.s32.totalorder %s18, 1
      %s285 = scalar_select %p284, %s18, 1
      %s286 = smul.addr %s285, 8
      %s287 = smul.addr %s286, 4
      %s288 = scalar_lea.vmem %s0, %s287
      %p289 = scmp.lt.s32.totalorder %s18, 1
      %s290 = scalar_select %p289, %s18, 1
      %s291 = smul.addr %s290, 8
      %s292 = smul.addr %s291, 8
      %s293 = scalar_lea.vmem %s1, %s292
      %p294 = scmp.lt.s32.totalorder %s18, 1
      %s295 = scalar_select %p294, %s18, 1
      %s296 = smul.addr %s295, 8
      %s297 = smul.addr %s296, 4
      %s298 = scalar_lea.vmem %s7, %s297
      %v300 = vld [vmem:[%s2] sm:$0xff]
      %v301 = vld [vmem:[%s2 + $0x8] sm:$0xff]
      %v302 = vld [vmem:[%s2 + $0x10] sm:$0xff]
      %v303 = vld [vmem:[%s2 + $0x18] sm:$0xff]
      %v304 = vld [vmem:[%s2 + $0x20] sm:$0xff]
      %v305 = vld [vmem:[%s2 + $0x28] sm:$0xff]
      %v306 = vld [vmem:[%s2 + $0x30] sm:$0xff]
      %v307 = vld [vmem:[%s2 + $0x38] sm:$0xff]
      %v308 = vld [vmem:[%s2 + $0x40] sm:$0xff]
      %v309 = vld [vmem:[%s2 + $0x48] sm:$0xff]
      %v310 = vld [vmem:[%s2 + $0x50] sm:$0xff]
      %v311 = vld [vmem:[%s2 + $0x58] sm:$0xff]
      %v312 = vld [vmem:[%s2 + $0x60] sm:$0xff]
      %v313 = vld [vmem:[%s2 + $0x68] sm:$0xff]
      %v314 = vld [vmem:[%s2 + $0x70] sm:$0xff]
      %v315 = vld [vmem:[%s2 + $0x78] sm:$0xff]
      %v316 = vld [vmem:[%s2 + $0x80] sm:$0xff]
      %v317 = vld [vmem:[%s2 + $0x88] sm:$0xff]
      %v318 = vld [vmem:[%s2 + $0x90] sm:$0xff]
      %v319 = vld [vmem:[%s2 + $0x98] sm:$0xff]
      %v320 = vld [vmem:[%s2 + $0xa0] sm:$0xff]
      %v321 = vld [vmem:[%s2 + $0xa8] sm:$0xff]
      %v322 = vld [vmem:[%s2 + $0xb0] sm:$0xff]
      %v323 = vld [vmem:[%s2 + $0xb8] sm:$0xff]
      %v324 = vld [vmem:[%s2 + $0xc0] sm:$0x1]
      %v325 = vld [vmem:[%s2 + $0xc8] sm:$0x1]
      %v326 = vld [vmem:[%s2 + $0xd0] sm:$0x1]
      %v327 = vld [vmem:[%s2 + $0xd8] sm:$0x1]
      %v328 = vld [vmem:[%s2 + $0xe0] sm:$0x1]
      %v329 = vld [vmem:[%s2 + $0xe8] sm:$0x1]
      %v330 = vld [vmem:[%s2 + $0xf0] sm:$0x1]
      %v331 = vld [vmem:[%s2 + $0xf8] sm:$0x1]
      %v332 = vld [vmem:[%s293] sm:$0xff]
      %v333 = vld [vmem:[%s293 + $0x8] sm:$0xff]
      %v334 = vld [vmem:[%s293 + $0x10] sm:$0xff]
      %v335 = vld [vmem:[%s293 + $0x18] sm:$0xff]
      %v336 = vld [vmem:[%s293 + $0x20] sm:$0xff]
      %v337 = vld [vmem:[%s293 + $0x28] sm:$0xff]
      %v338 = vld [vmem:[%s293 + $0x30] sm:$0xff]
      %v339 = vld [vmem:[%s293 + $0x38] sm:$0xff]
      %340 = vrot.lane.b32.xlu0 %v332, 8
      %v341 = vpop.permute.xlu0 %340
      %342 = vrot.lane.b32.xlu0 %v333, 8
      %v343 = vpop.permute.xlu0 %342
      %344 = vrot.lane.b32.xlu0 %v334, 8
      %v345 = vpop.permute.xlu0 %344
      %346 = vrot.lane.b32.xlu0 %v335, 8
      %v347 = vpop.permute.xlu0 %346
      %348 = vrot.lane.b32.xlu0 %v336, 8
      %v349 = vpop.permute.xlu0 %348
      %350 = vrot.lane.b32.xlu0 %v337, 8
      %v351 = vpop.permute.xlu0 %350
      %352 = vrot.lane.b32.xlu0 %v338, 8
      %v353 = vpop.permute.xlu0 %352
      %354 = vrot.lane.b32.xlu0 %v339, 8
      %v355 = vpop.permute.xlu0 %354
      %v356 = vlaneseq
      %v357 = vand.u32 %v356, 127
      %vm358 = vcmp.lt.s32.totalorder %v357, 8
      %v359 = vsel %vm358, %v353, %v355
      %v360 = vsel %vm358, %v351, %v353
      %v361 = vsel %vm358, %v349, %v351
      %v362 = vsel %vm358, %v347, %v349
      %v363 = vsel %vm358, %v345, %v347
      %v364 = vsel %vm358, %v343, %v345
      %v365 = vsel %vm358, %v341, %v343
      %v366 = vsel %vm358, %v355, %v341
      %v367 = vperm.slane %v300, 0
      %v368 = vperm.slane %v301, 0
      %v369 = vperm.slane %v302, 0
      %v370 = vperm.slane %v303, 0
      %v371 = vperm.slane %v304, 0
      %v372 = vperm.slane %v305, 0
      %v373 = vperm.slane %v306, 0
      %v374 = vperm.slane %v307, 0
      %v375 = vmul.f32 %v359, %v367
      %v376 = vmul.f32 %v366, %v368
      %v377 = vmul.f32 %v365, %v369
      %v378 = vmul.f32 %v364, %v370
      %v379 = vmul.f32 %v363, %v371
      %v380 = vmul.f32 %v362, %v372
      %v381 = vmul.f32 %v361, %v373
      %v382 = vmul.f32 %v360, %v374
      %383 = vrot.lane.b32.xlu0 %v332, 4
      %v384 = vpop.permute.xlu0 %383
      %385 = vrot.lane.b32.xlu0 %v333, 4
      %v386 = vpop.permute.xlu0 %385
      %387 = vrot.lane.b32.xlu0 %v334, 4
      %v388 = vpop.permute.xlu0 %387
      %389 = vrot.lane.b32.xlu0 %v335, 4
      %v390 = vpop.permute.xlu0 %389
      %391 = vrot.lane.b32.xlu0 %v336, 4
      %v392 = vpop.permute.xlu0 %391
      %393 = vrot.lane.b32.xlu0 %v337, 4
      %v394 = vpop.permute.xlu0 %393
      %395 = vrot.lane.b32.xlu0 %v338, 4
      %v396 = vpop.permute.xlu0 %395
      %397 = vrot.lane.b32.xlu0 %v339, 4
      %v398 = vpop.permute.xlu0 %397
      %vm399 = vcmp.lt.s32.totalorder %v357, 4
      %v400 = vsel %vm399, %v396, %v398
      %v401 = vsel %vm399, %v394, %v396
      %v402 = vsel %vm399, %v392, %v394
      %v403 = vsel %vm399, %v390, %v392
      %v404 = vsel %vm399, %v388, %v390
      %v405 = vsel %vm399, %v386, %v388
      %v406 = vsel %vm399, %v384, %v386
      %v407 = vsel %vm399, %v398, %v384
      %v408 = vperm.slane %v300, 1
      %v409 = vperm.slane %v301, 1
      %v410 = vperm.slane %v302, 1
      %v411 = vperm.slane %v303, 1
      %v412 = vperm.slane %v304, 1
      %v413 = vperm.slane %v305, 1
      %v414 = vperm.slane %v306, 1
      %v415 = vperm.slane %v307, 1
      %v416 = vmul.f32 %v400, %v408
      %v417 = vmul.f32 %v407, %v409
      %v418 = vmul.f32 %v406, %v410
      %v419 = vmul.f32 %v405, %v411
      %v420 = vmul.f32 %v404, %v412
      %v421 = vmul.f32 %v403, %v413
      %v422 = vmul.f32 %v402, %v414
      %v423 = vmul.f32 %v401, %v415
      %v424 = vperm.slane %v300, 2
      %v425 = vperm.slane %v301, 2
      %v426 = vperm.slane %v302, 2
      %v427 = vperm.slane %v303, 2
      %v428 = vperm.slane %v304, 2
      %v429 = vperm.slane %v305, 2
      %v430 = vperm.slane %v306, 2
      %v431 = vperm.slane %v307, 2
      %v432 = vmul.f32 %v339, %v424
      %v433 = vmul.f32 %v332, %v425
      %v434 = vmul.f32 %v333, %v426
      %v435 = vmul.f32 %v334, %v427
      %v436 = vmul.f32 %v335, %v428
      %v437 = vmul.f32 %v336, %v429
      %v438 = vmul.f32 %v337, %v430
      %v439 = vmul.f32 %v338, %v431
      %440 = vrot.lane.b32.xlu0 %v332, 120
      %v441 = vpop.permute.xlu0 %440
      %442 = vrot.lane.b32.xlu0 %v333, 120
      %v443 = vpop.permute.xlu0 %442
      %444 = vrot.lane.b32.xlu0 %v334, 120
      %v445 = vpop.permute.xlu0 %444
      %446 = vrot.lane.b32.xlu0 %v335, 120
      %v447 = vpop.permute.xlu0 %446
      %448 = vrot.lane.b32.xlu0 %v336, 120
      %v449 = vpop.permute.xlu0 %448
      %450 = vrot.lane.b32.xlu0 %v337, 120
      %v451 = vpop.permute.xlu0 %450
      %452 = vrot.lane.b32.xlu0 %v338, 120
      %v453 = vpop.permute.xlu0 %452
      %454 = vrot.lane.b32.xlu0 %v339, 120
      %v455 = vpop.permute.xlu0 %454
      %vm456 = vcmp.lt.s32.totalorder %v357, 120
      %v457 = vsel %vm456, %v453, %v455
      %v458 = vsel %vm456, %v451, %v453
      %v459 = vsel %vm456, %v449, %v451
      %v460 = vsel %vm456, %v447, %v449
      %v461 = vsel %vm456, %v445, %v447
      %v462 = vsel %vm456, %v443, %v445
      %v463 = vsel %vm456, %v441, %v443
      %v464 = vsel %vm456, %v455, %v441
      %v465 = vperm.slane %v300, 3
      %v466 = vperm.slane %v301, 3
      %v467 = vperm.slane %v302, 3
      %v468 = vperm.slane %v303, 3
      %v469 = vperm.slane %v304, 3
      %v470 = vperm.slane %v305, 3
      %v471 = vperm.slane %v306, 3
      %v472 = vperm.slane %v307, 3
      %v473 = vmul.f32 %v464, %v465
      %v474 = vmul.f32 %v463, %v466
      %v475 = vmul.f32 %v462, %v467
      %v476 = vmul.f32 %v461, %v468
      %v477 = vmul.f32 %v460, %v469
      %v478 = vmul.f32 %v459, %v470
      %v479 = vmul.f32 %v458, %v471
      %v480 = vmul.f32 %v457, %v472
      %481 = vrot.lane.b32.xlu0 %v332, 72
      %v482 = vpop.permute.xlu0 %481
      %483 = vrot.lane.b32.xlu0 %v333, 72
      %v484 = vpop.permute.xlu0 %483
      %485 = vrot.lane.b32.xlu0 %v334, 72
      %v486 = vpop.permute.xlu0 %485
      %487 = vrot.lane.b32.xlu0 %v335, 72
      %v488 = vpop.permute.xlu0 %487
      %489 = vrot.lane.b32.xlu0 %v336, 72
      %v490 = vpop.permute.xlu0 %489
      %491 = vrot.lane.b32.xlu0 %v337, 72
      %v492 = vpop.permute.xlu0 %491
      %493 = vrot.lane.b32.xlu0 %v338, 72
      %v494 = vpop.permute.xlu0 %493
      %495 = vrot.lane.b32.xlu0 %v339, 72
      %v496 = vpop.permute.xlu0 %495
      %vm497 = vcmp.lt.s32.totalorder %v357, 72
      %v498 = vsel %vm497, %v494, %v496
      %v499 = vsel %vm497, %v492, %v494
      %v500 = vsel %vm497, %v490, %v492
      %v501 = vsel %vm497, %v488, %v490
      %v502 = vsel %vm497, %v486, %v488
      %v503 = vsel %vm497, %v484, %v486
      %v504 = vsel %vm497, %v482, %v484
      %v505 = vsel %vm497, %v496, %v482
      %v506 = vperm.slane %v300, 4
      %v507 = vperm.slane %v301, 4
      %v508 = vperm.slane %v302, 4
      %v509 = vperm.slane %v303, 4
      %v510 = vperm.slane %v304, 4
      %v511 = vperm.slane %v305, 4
      %v512 = vperm.slane %v306, 4
      %v513 = vperm.slane %v307, 4
      %v514 = vmul.f32 %v505, %v506
      %v515 = vmul.f32 %v504, %v507
      %v516 = vmul.f32 %v503, %v508
      %v517 = vmul.f32 %v502, %v509
      %v518 = vmul.f32 %v501, %v510
      %v519 = vmul.f32 %v500, %v511
      %v520 = vmul.f32 %v499, %v512
      %v521 = vmul.f32 %v498, %v513
      %522 = vrot.lane.b32.xlu0 %v332, 68
      %v523 = vpop.permute.xlu0 %522
      %524 = vrot.lane.b32.xlu0 %v333, 68
      %v525 = vpop.permute.xlu0 %524
      %526 = vrot.lane.b32.xlu0 %v334, 68
      %v527 = vpop.permute.xlu0 %526
      %528 = vrot.lane.b32.xlu0 %v335, 68
      %v529 = vpop.permute.xlu0 %528
      %530 = vrot.lane.b32.xlu0 %v336, 68
      %v531 = vpop.permute.xlu0 %530
      %532 = vrot.lane.b32.xlu0 %v337, 68
      %v533 = vpop.permute.xlu0 %532
      %534 = vrot.lane.b32.xlu0 %v338, 68
      %v535 = vpop.permute.xlu0 %534
      %536 = vrot.lane.b32.xlu0 %v339, 68
      %v537 = vpop.permute.xlu0 %536
      %vm538 = vcmp.lt.s32.totalorder %v357, 68
      %v539 = vsel %vm538, %v535, %v537
      %v540 = vsel %vm538, %v533, %v535
      %v541 = vsel %vm538, %v531, %v533
      %v542 = vsel %vm538, %v529, %v531
      %v543 = vsel %vm538, %v527, %v529
      %v544 = vsel %vm538, %v525, %v527
      %v545 = vsel %vm538, %v523, %v525
      %v546 = vsel %vm538, %v537, %v523
      %v547 = vperm.slane %v300, 5
      %v548 = vperm.slane %v301, 5
      %v549 = vperm.slane %v302, 5
      %v550 = vperm.slane %v303, 5
      %v551 = vperm.slane %v304, 5
      %v552 = vperm.slane %v305, 5
      %v553 = vperm.slane %v306, 5
      %v554 = vperm.slane %v307, 5
      %v555 = vmul.f32 %v546, %v547
      %v556 = vmul.f32 %v545, %v548
      %v557 = vmul.f32 %v544, %v549
      %v558 = vmul.f32 %v543, %v550
      %v559 = vmul.f32 %v542, %v551
      %v560 = vmul.f32 %v541, %v552
      %v561 = vmul.f32 %v540, %v553
      %v562 = vmul.f32 %v539, %v554
      %563 = vrot.lane.b32.xlu0 %v332, 64
      %v564 = vpop.permute.xlu0 %563
      %565 = vrot.lane.b32.xlu0 %v333, 64
      %v566 = vpop.permute.xlu0 %565
      %567 = vrot.lane.b32.xlu0 %v334, 64
      %v568 = vpop.permute.xlu0 %567
      %569 = vrot.lane.b32.xlu0 %v335, 64
      %v570 = vpop.permute.xlu0 %569
      %571 = vrot.lane.b32.xlu0 %v336, 64
      %v572 = vpop.permute.xlu0 %571
      %573 = vrot.lane.b32.xlu0 %v337, 64
      %v574 = vpop.permute.xlu0 %573
      %575 = vrot.lane.b32.xlu0 %v338, 64
      %v576 = vpop.permute.xlu0 %575
      %577 = vrot.lane.b32.xlu0 %v339, 64
      %v578 = vpop.permute.xlu0 %577
      %vm579 = vcmp.lt.s32.totalorder %v357, 64
      %v580 = vsel %vm579, %v576, %v578
      %v581 = vsel %vm579, %v574, %v576
      %v582 = vsel %vm579, %v572, %v574
      %v583 = vsel %vm579, %v570, %v572
      %v584 = vsel %vm579, %v568, %v570
      %v585 = vsel %vm579, %v566, %v568
      %v586 = vsel %vm579, %v564, %v566
      %v587 = vsel %vm579, %v578, %v564
      %v588 = vperm.slane %v300, 6
      %v589 = vperm.slane %v301, 6
      %v590 = vperm.slane %v302, 6
      %v591 = vperm.slane %v303, 6
      %v592 = vperm.slane %v304, 6
      %v593 = vperm.slane %v305, 6
      %v594 = vperm.slane %v306, 6
      %v595 = vperm.slane %v307, 6
      %v596 = vmul.f32 %v587, %v588
      %v597 = vmul.f32 %v586, %v589
      %v598 = vmul.f32 %v585, %v590
      %v599 = vmul.f32 %v584, %v591
      %v600 = vmul.f32 %v583, %v592
      %v601 = vmul.f32 %v582, %v593
      %v602 = vmul.f32 %v581, %v594
      %v603 = vmul.f32 %v580, %v595
      %604 = vrot.lane.b32.xlu0 %v332, 56
      %v605 = vpop.permute.xlu0 %604
      %606 = vrot.lane.b32.xlu0 %v333, 56
      %v607 = vpop.permute.xlu0 %606
      %608 = vrot.lane.b32.xlu0 %v334, 56
      %v609 = vpop.permute.xlu0 %608
      %610 = vrot.lane.b32.xlu0 %v335, 56
      %v611 = vpop.permute.xlu0 %610
      %612 = vrot.lane.b32.xlu0 %v336, 56
      %v613 = vpop.permute.xlu0 %612
      %614 = vrot.lane.b32.xlu0 %v337, 56
      %v615 = vpop.permute.xlu0 %614
      %616 = vrot.lane.b32.xlu0 %v338, 56
      %v617 = vpop.permute.xlu0 %616
      %618 = vrot.lane.b32.xlu0 %v339, 56
      %v619 = vpop.permute.xlu0 %618
      %vm620 = vcmp.lt.s32.totalorder %v357, 56
      %v621 = vsel %vm620, %v617, %v619
      %v622 = vsel %vm620, %v615, %v617
      %v623 = vsel %vm620, %v613, %v615
      %v624 = vsel %vm620, %v611, %v613
      %v625 = vsel %vm620, %v609, %v611
      %v626 = vsel %vm620, %v607, %v609
      %v627 = vsel %vm620, %v605, %v607
      %v628 = vsel %vm620, %v619, %v605
      %v629 = vperm.slane %v300, 7
      %v630 = vperm.slane %v301, 7
      %v631 = vperm.slane %v302, 7
      %v632 = vperm.slane %v303, 7
      %v633 = vperm.slane %v304, 7
      %v634 = vperm.slane %v305, 7
      %v635 = vperm.slane %v306, 7
      %v636 = vperm.slane %v307, 7
      %v637 = vmul.f32 %v628, %v629
      %v638 = vmul.f32 %v627, %v630
      %v639 = vmul.f32 %v626, %v631
      %v640 = vmul.f32 %v625, %v632
      %v641 = vmul.f32 %v624, %v633
      %v642 = vmul.f32 %v623, %v634
      %v643 = vmul.f32 %v622, %v635
      %v644 = vmul.f32 %v621, %v636
      %v645 = vperm.slane %v308, 0
      %v646 = vperm.slane %v309, 0
      %v647 = vperm.slane %v310, 0
      %v648 = vperm.slane %v311, 0
      %v649 = vperm.slane %v312, 0
      %v650 = vperm.slane %v313, 0
      %v651 = vperm.slane %v314, 0
      %v652 = vperm.slane %v315, 0
      %v653 = vmul.f32 %v366, %v645
      %v654 = vmul.f32 %v365, %v646
      %v655 = vmul.f32 %v364, %v647
      %v656 = vmul.f32 %v363, %v648
      %v657 = vmul.f32 %v362, %v649
      %v658 = vmul.f32 %v361, %v650
      %v659 = vmul.f32 %v360, %v651
      %v660 = vmul.f32 %v359, %v652
      %v661 = vperm.slane %v308, 1
      %v662 = vperm.slane %v309, 1
      %v663 = vperm.slane %v310, 1
      %v664 = vperm.slane %v311, 1
      %v665 = vperm.slane %v312, 1
      %v666 = vperm.slane %v313, 1
      %v667 = vperm.slane %v314, 1
      %v668 = vperm.slane %v315, 1
      %v669 = vmul.f32 %v407, %v661
      %v670 = vmul.f32 %v406, %v662
      %v671 = vmul.f32 %v405, %v663
      %v672 = vmul.f32 %v404, %v664
      %v673 = vmul.f32 %v403, %v665
      %v674 = vmul.f32 %v402, %v666
      %v675 = vmul.f32 %v401, %v667
      %v676 = vmul.f32 %v400, %v668
      %v677 = vperm.slane %v308, 2
      %v678 = vperm.slane %v309, 2
      %v679 = vperm.slane %v310, 2
      %v680 = vperm.slane %v311, 2
      %v681 = vperm.slane %v312, 2
      %v682 = vperm.slane %v313, 2
      %v683 = vperm.slane %v314, 2
      %v684 = vperm.slane %v315, 2
      %v685 = vmul.f32 %v332, %v677
      %v686 = vmul.f32 %v333, %v678
      %v687 = vmul.f32 %v334, %v679
      %v688 = vmul.f32 %v335, %v680
      %v689 = vmul.f32 %v336, %v681
      %v690 = vmul.f32 %v337, %v682
      %v691 = vmul.f32 %v338, %v683
      %v692 = vmul.f32 %v339, %v684
      %v693 = vperm.slane %v308, 3
      %v694 = vperm.slane %v309, 3
      %v695 = vperm.slane %v310, 3
      %v696 = vperm.slane %v311, 3
      %v697 = vperm.slane %v312, 3
      %v698 = vperm.slane %v313, 3
      %v699 = vperm.slane %v314, 3
      %v700 = vperm.slane %v315, 3
      %v701 = vmul.f32 %v463, %v693
      %v702 = vmul.f32 %v462, %v694
      %v703 = vmul.f32 %v461, %v695
      %v704 = vmul.f32 %v460, %v696
      %v705 = vmul.f32 %v459, %v697
      %v706 = vmul.f32 %v458, %v698
      %v707 = vmul.f32 %v457, %v699
      %v708 = vmul.f32 %v464, %v700
      %v709 = vperm.slane %v308, 4
      %v710 = vperm.slane %v309, 4
      %v711 = vperm.slane %v310, 4
      %v712 = vperm.slane %v311, 4
      %v713 = vperm.slane %v312, 4
      %v714 = vperm.slane %v313, 4
      %v715 = vperm.slane %v314, 4
      %v716 = vperm.slane %v315, 4
      %v717 = vmul.f32 %v365, %v709
      %v718 = vmul.f32 %v364, %v710
      %v719 = vmul.f32 %v363, %v711
      %v720 = vmul.f32 %v362, %v712
      %v721 = vmul.f32 %v361, %v713
      %v722 = vmul.f32 %v360, %v714
      %v723 = vmul.f32 %v359, %v715
      %v724 = vmul.f32 %v366, %v716
      %v725 = vperm.slane %v308, 5
      %v726 = vperm.slane %v309, 5
      %v727 = vperm.slane %v310, 5
      %v728 = vperm.slane %v311, 5
      %v729 = vperm.slane %v312, 5
      %v730 = vperm.slane %v313, 5
      %v731 = vperm.slane %v314, 5
      %v732 = vperm.slane %v315, 5
      %v733 = vmul.f32 %v406, %v725
      %v734 = vmul.f32 %v405, %v726
      %v735 = vmul.f32 %v404, %v727
      %v736 = vmul.f32 %v403, %v728
      %v737 = vmul.f32 %v402, %v729
      %v738 = vmul.f32 %v401, %v730
      %v739 = vmul.f32 %v400, %v731
      %v740 = vmul.f32 %v407, %v732
      %v741 = vperm.slane %v308, 6
      %v742 = vperm.slane %v309, 6
      %v743 = vperm.slane %v310, 6
      %v744 = vperm.slane %v311, 6
      %v745 = vperm.slane %v312, 6
      %v746 = vperm.slane %v313, 6
      %v747 = vperm.slane %v314, 6
      %v748 = vperm.slane %v315, 6
      %v749 = vmul.f32 %v333, %v741
      %v750 = vmul.f32 %v334, %v742
      %v751 = vmul.f32 %v335, %v743
      %v752 = vmul.f32 %v336, %v744
      %v753 = vmul.f32 %v337, %v745
      %v754 = vmul.f32 %v338, %v746
      %v755 = vmul.f32 %v339, %v747
      %v756 = vmul.f32 %v332, %v748
      %v757 = vperm.slane %v308, 7
      %v758 = vperm.slane %v309, 7
      %v759 = vperm.slane %v310, 7
      %v760 = vperm.slane %v311, 7
      %v761 = vperm.slane %v312, 7
      %v762 = vperm.slane %v313, 7
      %v763 = vperm.slane %v314, 7
      %v764 = vperm.slane %v315, 7
      %v765 = vmul.f32 %v462, %v757
      %v766 = vmul.f32 %v461, %v758
      %v767 = vmul.f32 %v460, %v759
      %v768 = vmul.f32 %v459, %v760
      %v769 = vmul.f32 %v458, %v761
      %v770 = vmul.f32 %v457, %v762
      %v771 = vmul.f32 %v464, %v763
      %v772 = vmul.f32 %v463, %v764
      %v773 = vpack.c.bf16 %v416, %v375
      %v774 = vpack.c.bf16 %v417, %v376
      %v775 = vpack.c.bf16 %v418, %v377
      %v776 = vpack.c.bf16 %v419, %v378
      %v777 = vpack.c.bf16 %v420, %v379
      %v778 = vpack.c.bf16 %v421, %v380
      %v779 = vpack.c.bf16 %v422, %v381
      %v780 = vpack.c.bf16 %v423, %v382
      %v781 = vpack.c.bf16 %v473, %v432
      %v782 = vpack.c.bf16 %v474, %v433
      %v783 = vpack.c.bf16 %v475, %v434
      %v784 = vpack.c.bf16 %v476, %v435
      %v785 = vpack.c.bf16 %v477, %v436
      %v786 = vpack.c.bf16 %v478, %v437
      %v787 = vpack.c.bf16 %v479, %v438
      %v788 = vpack.c.bf16 %v480, %v439
      %v789 = vpack.c.bf16 %v555, %v514
      %v790 = vpack.c.bf16 %v556, %v515
      %v791 = vpack.c.bf16 %v557, %v516
      %v792 = vpack.c.bf16 %v558, %v517
      %v793 = vpack.c.bf16 %v559, %v518
      %v794 = vpack.c.bf16 %v560, %v519
      %v795 = vpack.c.bf16 %v561, %v520
      %v796 = vpack.c.bf16 %v562, %v521
      %v797 = vpack.c.bf16 %v637, %v596
      %v798 = vpack.c.bf16 %v638, %v597
      %v799 = vpack.c.bf16 %v639, %v598
      %v800 = vpack.c.bf16 %v640, %v599
      %v801 = vpack.c.bf16 %v641, %v600
      %v802 = vpack.c.bf16 %v642, %v601
      %v803 = vpack.c.bf16 %v643, %v602
      %v804 = vpack.c.bf16 %v644, %v603
      %v805 = vpack.c.bf16 %v669, %v653
      %v806 = vpack.c.bf16 %v670, %v654
      %v807 = vpack.c.bf16 %v671, %v655
      %v808 = vpack.c.bf16 %v672, %v656
      %v809 = vpack.c.bf16 %v673, %v657
      %v810 = vpack.c.bf16 %v674, %v658
      %v811 = vpack.c.bf16 %v675, %v659
      %v812 = vpack.c.bf16 %v676, %v660
      %v813 = vpack.c.bf16 %v701, %v685
      %v814 = vpack.c.bf16 %v702, %v686
      %v815 = vpack.c.bf16 %v703, %v687
      %v816 = vpack.c.bf16 %v704, %v688
      %v817 = vpack.c.bf16 %v705, %v689
      %v818 = vpack.c.bf16 %v706, %v690
      %v819 = vpack.c.bf16 %v707, %v691
      %v820 = vpack.c.bf16 %v708, %v692
      %v821 = vpack.c.bf16 %v733, %v717
      %v822 = vpack.c.bf16 %v734, %v718
      %v823 = vpack.c.bf16 %v735, %v719
      %v824 = vpack.c.bf16 %v736, %v720
      %v825 = vpack.c.bf16 %v737, %v721
      %v826 = vpack.c.bf16 %v738, %v722
      %v827 = vpack.c.bf16 %v739, %v723
      %v828 = vpack.c.bf16 %v740, %v724
      %v829 = vpack.c.bf16 %v765, %v749
      %v830 = vpack.c.bf16 %v766, %v750
      %v831 = vpack.c.bf16 %v767, %v751
      %v832 = vpack.c.bf16 %v768, %v752
      %v833 = vpack.c.bf16 %v769, %v753
      %v834 = vpack.c.bf16 %v770, %v754
      %v835 = vpack.c.bf16 %v771, %v755
      %v836 = vpack.c.bf16 %v772, %v756
      %v837 = vld [vmem:[%s3] sm:$0x3]
      %v838 = vld [vmem:[%s4] sm:$0xf]
      %840 = vset.pattern.permute.xlu0 0
      %841 = vperm.xlu0 %840, %v838
      %v842 = vpop.permute.xlu0 %841
      %844 = vmatpush.bf16.msra.mxu0 %v829
      %845 = vmatpush.bf16.msra.mxu0 %v821
      %846 = vmatpush.bf16.msra.mxu0 %v813
      %847 = vmatpush.bf16.msra.mxu0 %v805
      %848 = vmatpush.bf16.msra.mxu0 %v797
      %849 = vmatpush.bf16.msra.mxu0 %v789
      %850 = vmatpush.bf16.msra.mxu0 %v781
      %851 = vmatpush.bf16.msra.mxu0 %v773
      %852 = vmatmul.bf16.gmra.mxu0 %v837
      %v853 = vpop.f32.mrf.mxu0
      %v854 = vadd.f32 %v842, %v853
      %v855 = vpop.f32.mrf.mxu0
      %856 = vdwg.mxu0
      %857 = vmatpush.bf16.msra.mxu0 %v830
      %858 = vmatpush.bf16.msra.mxu0 %v822
      %859 = vmatpush.bf16.msra.mxu0 %v814
      %860 = vmatpush.bf16.msra.mxu0 %v806
      %861 = vmatpush.bf16.msra.mxu0 %v798
      %862 = vmatpush.bf16.msra.mxu0 %v790
      %863 = vmatpush.bf16.msra.mxu0 %v782
      %864 = vmatpush.bf16.msra.mxu0 %v774
      %865 = vmatmul.bf16.gmra.mxu0 %v837
      %v866 = vpop.f32.mrf.mxu0
      %v867 = vadd.f32 %v842, %v866
      %v868 = vpop.f32.mrf.mxu0
      %869 = vdwg.mxu0
      %870 = vmatpush.bf16.msra.mxu0 %v831
      %871 = vmatpush.bf16.msra.mxu0 %v823
      %872 = vmatpush.bf16.msra.mxu0 %v815
      %873 = vmatpush.bf16.msra.mxu0 %v807
      %874 = vmatpush.bf16.msra.mxu0 %v799
      %875 = vmatpush.bf16.msra.mxu0 %v791
      %876 = vmatpush.bf16.msra.mxu0 %v783
      %877 = vmatpush.bf16.msra.mxu0 %v775
      %878 = vmatmul.bf16.gmra.mxu0 %v837
      %v879 = vpop.f32.mrf.mxu0
      %v880 = vadd.f32 %v842, %v879
      %v881 = vpop.f32.mrf.mxu0
      %882 = vdwg.mxu0
      %883 = vmatpush.bf16.msra.mxu0 %v832
      %884 = vmatpush.bf16.msra.mxu0 %v824
      %885 = vmatpush.bf16.msra.mxu0 %v816
      %886 = vmatpush.bf16.msra.mxu0 %v808
      %887 = vmatpush.bf16.msra.mxu0 %v800
      %888 = vmatpush.bf16.msra.mxu0 %v792
      %889 = vmatpush.bf16.msra.mxu0 %v784
      %890 = vmatpush.bf16.msra.mxu0 %v776
      %891 = vmatmul.bf16.gmra.mxu0 %v837
      %v892 = vpop.f32.mrf.mxu0
      %v893 = vadd.f32 %v842, %v892
      %v894 = vpop.f32.mrf.mxu0
      %895 = vdwg.mxu0
      %896 = vmatpush.bf16.msra.mxu0 %v833
      %897 = vmatpush.bf16.msra.mxu0 %v825
      %898 = vmatpush.bf16.msra.mxu0 %v817
      %899 = vmatpush.bf16.msra.mxu0 %v809
      %900 = vmatpush.bf16.msra.mxu0 %v801
      %901 = vmatpush.bf16.msra.mxu0 %v793
      %902 = vmatpush.bf16.msra.mxu0 %v785
      %903 = vmatpush.bf16.msra.mxu0 %v777
      %904 = vmatmul.bf16.gmra.mxu0 %v837
      %v905 = vpop.f32.mrf.mxu0
      %v906 = vadd.f32 %v842, %v905
      %v907 = vpop.f32.mrf.mxu0
      %908 = vdwg.mxu0
      %909 = vmatpush.bf16.msra.mxu0 %v834
      %910 = vmatpush.bf16.msra.mxu0 %v826
      %911 = vmatpush.bf16.msra.mxu0 %v818
      %912 = vmatpush.bf16.msra.mxu0 %v810
      %913 = vmatpush.bf16.msra.mxu0 %v802
      %914 = vmatpush.bf16.msra.mxu0 %v794
      %915 = vmatpush.bf16.msra.mxu0 %v786
      %916 = vmatpush.bf16.msra.mxu0 %v778
      %917 = vmatmul.bf16.gmra.mxu0 %v837
      %v918 = vpop.f32.mrf.mxu0
      %v919 = vadd.f32 %v842, %v918
      %v920 = vpop.f32.mrf.mxu0
      %921 = vdwg.mxu0
      %922 = vmatpush.bf16.msra.mxu0 %v835
      %923 = vmatpush.bf16.msra.mxu0 %v827
      %924 = vmatpush.bf16.msra.mxu0 %v819
      %925 = vmatpush.bf16.msra.mxu0 %v811
      %926 = vmatpush.bf16.msra.mxu0 %v803
      %927 = vmatpush.bf16.msra.mxu0 %v795
      %928 = vmatpush.bf16.msra.mxu0 %v787
      %929 = vmatpush.bf16.msra.mxu0 %v779
      %930 = vmatmul.bf16.gmra.mxu0 %v837
      %v931 = vpop.f32.mrf.mxu0
      %v932 = vadd.f32 %v842, %v931
      %v933 = vpop.f32.mrf.mxu0
      %934 = vdwg.mxu0
      %935 = vmatpush.bf16.msra.mxu0 %v836
      %936 = vmatpush.bf16.msra.mxu0 %v828
      %937 = vmatpush.bf16.msra.mxu0 %v820
      %938 = vmatpush.bf16.msra.mxu0 %v812
      %939 = vmatpush.bf16.msra.mxu0 %v804
      %940 = vmatpush.bf16.msra.mxu0 %v796
      %941 = vmatpush.bf16.msra.mxu0 %v788
      %942 = vmatpush.bf16.msra.mxu0 %v780
      %943 = vmatmul.bf16.gmra.mxu0 %v837
      %v944 = vpop.f32.mrf.mxu0
      %v945 = vadd.f32 %v842, %v944
      %v946 = vpop.f32.mrf.mxu0
      %947 = vdwg.mxu0
      %v948 = vld [vmem:[%s288] sm:$0xff]
      %v949 = vld [vmem:[%s288 + $0x8] sm:$0xff]
      %v950 = vld [vmem:[%s288 + $0x10] sm:$0xff]
      %v951 = vld [vmem:[%s288 + $0x18] sm:$0xff]
      %956 = vst [vmem:[#allocation1] ss:$2 sm:$0xff] %v948
      %s957 = scalar_lea.vmem [#allocation1], 16
      %958 = vst [vmem:[%s957] ss:$2 sm:$0xff] %v949
      %s959 = scalar_lea.vmem [#allocation1], 32
      %960 = vst [vmem:[%s959] ss:$2 sm:$0xff] %v950
      %s961 = scalar_lea.vmem [#allocation1], 48
      %962 = vst [vmem:[%s961] ss:$2 sm:$0xff] %v951
      %v963 = vld.sshfl [vmem:[#allocation1] sm:$0xff pattern:$0x75316420]
      %v964 = vld.sshfl [vmem:[#allocation1 + $0x8] sm:$0xff pattern:$0x75316420]
      %v965 = vld.sshfl [vmem:[#allocation1 + $0x10] sm:$0xff pattern:$0x75316420]
      %v966 = vld.sshfl [vmem:[#allocation1 + $0x18] sm:$0xff pattern:$0x75316420]
      %v967 = vld.sshfl [vmem:[#allocation1 + $0x20] sm:$0xff pattern:$0x75316420]
      %v968 = vld.sshfl [vmem:[#allocation1 + $0x28] sm:$0xff pattern:$0x75316420]
      %v969 = vld.sshfl [vmem:[#allocation1 + $0x30] sm:$0xff pattern:$0x75316420]
      %v970 = vld.sshfl [vmem:[#allocation1 + $0x38] sm:$0xff pattern:$0x75316420]
      %v987 = vrot.slane %v854, 4
      %v988 = vrot.slane %v867, 4
      %v989 = vrot.slane %v880, 4
      %v990 = vrot.slane %v893, 4
      %v991 = vrot.slane %v906, 4
      %v992 = vrot.slane %v919, 4
      %v993 = vrot.slane %v932, 4
      %v994 = vrot.slane %v945, 4
      %vm1003 = vcmask 1043456
      %v1004 = vsel %vm1003, %v963, %v987
      %v1005 = vsel %vm1003, %v964, %v988
      %v1006 = vsel %vm1003, %v965, %v989
      %v1007 = vsel %vm1003, %v966, %v990
      %v1008 = vsel %vm1003, %v967, %v991
      %v1009 = vsel %vm1003, %v968, %v992
      %v1010 = vsel %vm1003, %v969, %v993
      %v1011 = vsel %vm1003, %v970, %v994
      %1012 = vrot.lane.b32.xlu0 %v1004, 68
      %v1013 = vpop.permute.xlu0 %1012
      %1014 = vrot.lane.b32.xlu0 %v1005, 68
      %v1015 = vpop.permute.xlu0 %1014
      %1016 = vrot.lane.b32.xlu0 %v1006, 68
      %v1017 = vpop.permute.xlu0 %1016
      %1018 = vrot.lane.b32.xlu0 %v1007, 68
      %v1019 = vpop.permute.xlu0 %1018
      %1020 = vrot.lane.b32.xlu0 %v1008, 68
      %v1021 = vpop.permute.xlu0 %1020
      %1022 = vrot.lane.b32.xlu0 %v1009, 68
      %v1023 = vpop.permute.xlu0 %1022
      %1024 = vrot.lane.b32.xlu0 %v1010, 68
      %v1025 = vpop.permute.xlu0 %1024
      %1026 = vrot.lane.b32.xlu0 %v1011, 68
      %v1027 = vpop.permute.xlu0 %1026
      %v1028 = vsel %vm538, %v1025, %v1027
      %v1029 = vsel %vm538, %v1023, %v1025
      %v1030 = vsel %vm538, %v1021, %v1023
      %v1031 = vsel %vm538, %v1019, %v1021
      %v1032 = vsel %vm538, %v1017, %v1019
      %v1033 = vsel %vm538, %v1015, %v1017
      %v1034 = vsel %vm538, %v1013, %v1015
      %v1035 = vsel %vm538, %v1027, %v1013
      %v1036 = vperm.slane %v316, 0
      %v1037 = vperm.slane %v317, 0
      %v1038 = vperm.slane %v318, 0
      %v1039 = vperm.slane %v319, 0
      %v1040 = vperm.slane %v320, 0
      %v1041 = vperm.slane %v321, 0
      %v1042 = vperm.slane %v322, 0
      %v1043 = vperm.slane %v323, 0
      %v1044 = vmul.f32 %v1035, %v1036
      %v1045 = vmul.f32 %v1034, %v1037
      %v1046 = vmul.f32 %v1033, %v1038
      %v1047 = vmul.f32 %v1032, %v1039
      %v1048 = vmul.f32 %v1031, %v1040
      %v1049 = vmul.f32 %v1030, %v1041
      %v1050 = vmul.f32 %v1029, %v1042
      %v1051 = vmul.f32 %v1028, %v1043
      %1052 = vrot.lane.b32.xlu0 %v1004, 64
      %v1053 = vpop.permute.xlu0 %1052
      %1054 = vrot.lane.b32.xlu0 %v1005, 64
      %v1055 = vpop.permute.xlu0 %1054
      %1056 = vrot.lane.b32.xlu0 %v1006, 64
      %v1057 = vpop.permute.xlu0 %1056
      %1058 = vrot.lane.b32.xlu0 %v1007, 64
      %v1059 = vpop.permute.xlu0 %1058
      %1060 = vrot.lane.b32.xlu0 %v1008, 64
      %v1061 = vpop.permute.xlu0 %1060
      %1062 = vrot.lane.b32.xlu0 %v1009, 64
      %v1063 = vpop.permute.xlu0 %1062
      %1064 = vrot.lane.b32.xlu0 %v1010, 64
      %v1065 = vpop.permute.xlu0 %1064
      %1066 = vrot.lane.b32.xlu0 %v1011, 64
      %v1067 = vpop.permute.xlu0 %1066
      %v1068 = vsel %vm579, %v1065, %v1067
      %v1069 = vsel %vm579, %v1063, %v1065
      %v1070 = vsel %vm579, %v1061, %v1063
      %v1071 = vsel %vm579, %v1059, %v1061
      %v1072 = vsel %vm579, %v1057, %v1059
      %v1073 = vsel %vm579, %v1055, %v1057
      %v1074 = vsel %vm579, %v1053, %v1055
      %v1075 = vsel %vm579, %v1067, %v1053
      %v1076 = vperm.slane %v316, 1
      %v1077 = vperm.slane %v317, 1
      %v1078 = vperm.slane %v318, 1
      %v1079 = vperm.slane %v319, 1
      %v1080 = vperm.slane %v320, 1
      %v1081 = vperm.slane %v321, 1
      %v1082 = vperm.slane %v322, 1
      %v1083 = vperm.slane %v323, 1
      %v1084 = vmul.f32 %v1075, %v1076
      %v1085 = vmul.f32 %v1074, %v1077
      %v1086 = vmul.f32 %v1073, %v1078
      %v1087 = vmul.f32 %v1072, %v1079
      %v1088 = vmul.f32 %v1071, %v1080
      %v1089 = vmul.f32 %v1070, %v1081
      %v1090 = vmul.f32 %v1069, %v1082
      %v1091 = vmul.f32 %v1068, %v1083
      %1092 = vrot.lane.b32.xlu0 %v1004, 60
      %v1093 = vpop.permute.xlu0 %1092
      %1094 = vrot.lane.b32.xlu0 %v1005, 60
      %v1095 = vpop.permute.xlu0 %1094
      %1096 = vrot.lane.b32.xlu0 %v1006, 60
      %v1097 = vpop.permute.xlu0 %1096
      %1098 = vrot.lane.b32.xlu0 %v1007, 60
      %v1099 = vpop.permute.xlu0 %1098
      %1100 = vrot.lane.b32.xlu0 %v1008, 60
      %v1101 = vpop.permute.xlu0 %1100
      %1102 = vrot.lane.b32.xlu0 %v1009, 60
      %v1103 = vpop.permute.xlu0 %1102
      %1104 = vrot.lane.b32.xlu0 %v1010, 60
      %v1105 = vpop.permute.xlu0 %1104
      %1106 = vrot.lane.b32.xlu0 %v1011, 60
      %v1107 = vpop.permute.xlu0 %1106
      %vm1108 = vcmp.lt.s32.totalorder %v357, 60
      %v1109 = vsel %vm1108, %v1105, %v1107
      %v1110 = vsel %vm1108, %v1103, %v1105
      %v1111 = vsel %vm1108, %v1101, %v1103
      %v1112 = vsel %vm1108, %v1099, %v1101
      %v1113 = vsel %vm1108, %v1097, %v1099
      %v1114 = vsel %vm1108, %v1095, %v1097
      %v1115 = vsel %vm1108, %v1093, %v1095
      %v1116 = vsel %vm1108, %v1107, %v1093
      %v1117 = vperm.slane %v316, 2
      %v1118 = vperm.slane %v317, 2
      %v1119 = vperm.slane %v318, 2
      %v1120 = vperm.slane %v319, 2
      %v1121 = vperm.slane %v320, 2
      %v1122 = vperm.slane %v321, 2
      %v1123 = vperm.slane %v322, 2
      %v1124 = vperm.slane %v323, 2
      %v1125 = vmul.f32 %v1116, %v1117
      %v1126 = vmul.f32 %v1115, %v1118
      %v1127 = vmul.f32 %v1114, %v1119
      %v1128 = vmul.f32 %v1113, %v1120
      %v1129 = vmul.f32 %v1112, %v1121
      %v1130 = vmul.f32 %v1111, %v1122
      %v1131 = vmul.f32 %v1110, %v1123
      %v1132 = vmul.f32 %v1109, %v1124
      %1133 = vrot.lane.b32.xlu0 %v1004, 4
      %v1134 = vpop.permute.xlu0 %1133
      %1135 = vrot.lane.b32.xlu0 %v1005, 4
      %v1136 = vpop.permute.xlu0 %1135
      %1137 = vrot.lane.b32.xlu0 %v1006, 4
      %v1138 = vpop.permute.xlu0 %1137
      %1139 = vrot.lane.b32.xlu0 %v1007, 4
      %v1140 = vpop.permute.xlu0 %1139
      %1141 = vrot.lane.b32.xlu0 %v1008, 4
      %v1142 = vpop.permute.xlu0 %1141
      %1143 = vrot.lane.b32.xlu0 %v1009, 4
      %v1144 = vpop.permute.xlu0 %1143
      %1145 = vrot.lane.b32.xlu0 %v1010, 4
      %v1146 = vpop.permute.xlu0 %1145
      %1147 = vrot.lane.b32.xlu0 %v1011, 4
      %v1148 = vpop.permute.xlu0 %1147
      %v1149 = vsel %vm399, %v1146, %v1148
      %v1150 = vsel %vm399, %v1144, %v1146
      %v1151 = vsel %vm399, %v1142, %v1144
      %v1152 = vsel %vm399, %v1140, %v1142
      %v1153 = vsel %vm399, %v1138, %v1140
      %v1154 = vsel %vm399, %v1136, %v1138
      %v1155 = vsel %vm399, %v1134, %v1136
      %v1156 = vsel %vm399, %v1148, %v1134
      %v1157 = vperm.slane %v316, 3
      %v1158 = vperm.slane %v317, 3
      %v1159 = vperm.slane %v318, 3
      %v1160 = vperm.slane %v319, 3
      %v1161 = vperm.slane %v320, 3
      %v1162 = vperm.slane %v321, 3
      %v1163 = vperm.slane %v322, 3
      %v1164 = vperm.slane %v323, 3
      %v1165 = vmul.f32 %v1156, %v1157
      %v1166 = vmul.f32 %v1155, %v1158
      %v1167 = vmul.f32 %v1154, %v1159
      %v1168 = vmul.f32 %v1153, %v1160
      %v1169 = vmul.f32 %v1152, %v1161
      %v1170 = vmul.f32 %v1151, %v1162
      %v1171 = vmul.f32 %v1150, %v1163
      %v1172 = vmul.f32 %v1149, %v1164
      %v1173 = vperm.slane %v316, 4
      %v1174 = vperm.slane %v317, 4
      %v1175 = vperm.slane %v318, 4
      %v1176 = vperm.slane %v319, 4
      %v1177 = vperm.slane %v320, 4
      %v1178 = vperm.slane %v321, 4
      %v1179 = vperm.slane %v322, 4
      %v1180 = vperm.slane %v323, 4
      %v1181 = vmul.f32 %v1004, %v1173
      %v1182 = vmul.f32 %v1005, %v1174
      %v1183 = vmul.f32 %v1006, %v1175
      %v1184 = vmul.f32 %v1007, %v1176
      %v1185 = vmul.f32 %v1008, %v1177
      %v1186 = vmul.f32 %v1009, %v1178
      %v1187 = vmul.f32 %v1010, %v1179
      %v1188 = vmul.f32 %v1011, %v1180
      %1189 = vrot.lane.b32.xlu0 %v1004, 124
      %v1190 = vpop.permute.xlu0 %1189
      %1191 = vrot.lane.b32.xlu0 %v1005, 124
      %v1192 = vpop.permute.xlu0 %1191
      %1193 = vrot.lane.b32.xlu0 %v1006, 124
      %v1194 = vpop.permute.xlu0 %1193
      %1195 = vrot.lane.b32.xlu0 %v1007, 124
      %v1196 = vpop.permute.xlu0 %1195
      %1197 = vrot.lane.b32.xlu0 %v1008, 124
      %v1198 = vpop.permute.xlu0 %1197
      %1199 = vrot.lane.b32.xlu0 %v1009, 124
      %v1200 = vpop.permute.xlu0 %1199
      %1201 = vrot.lane.b32.xlu0 %v1010, 124
      %v1202 = vpop.permute.xlu0 %1201
      %1203 = vrot.lane.b32.xlu0 %v1011, 124
      %v1204 = vpop.permute.xlu0 %1203
      %vm1205 = vcmp.lt.s32.totalorder %v357, 124
      %v1206 = vsel %vm1205, %v1202, %v1204
      %v1207 = vsel %vm1205, %v1200, %v1202
      %v1208 = vsel %vm1205, %v1198, %v1200
      %v1209 = vsel %vm1205, %v1196, %v1198
      %v1210 = vsel %vm1205, %v1194, %v1196
      %v1211 = vsel %vm1205, %v1192, %v1194
      %v1212 = vsel %vm1205, %v1190, %v1192
      %v1213 = vsel %vm1205, %v1204, %v1190
      %v1214 = vperm.slane %v316, 5
      %v1215 = vperm.slane %v317, 5
      %v1216 = vperm.slane %v318, 5
      %v1217 = vperm.slane %v319, 5
      %v1218 = vperm.slane %v320, 5
      %v1219 = vperm.slane %v321, 5
      %v1220 = vperm.slane %v322, 5
      %v1221 = vperm.slane %v323, 5
      %v1222 = vmul.f32 %v1212, %v1214
      %v1223 = vmul.f32 %v1211, %v1215
      %v1224 = vmul.f32 %v1210, %v1216
      %v1225 = vmul.f32 %v1209, %v1217
      %v1226 = vmul.f32 %v1208, %v1218
      %v1227 = vmul.f32 %v1207, %v1219
      %v1228 = vmul.f32 %v1206, %v1220
      %v1229 = vmul.f32 %v1213, %v1221
      %v1230 = vperm.slane %v316, 6
      %v1231 = vperm.slane %v317, 6
      %v1232 = vperm.slane %v318, 6
      %v1233 = vperm.slane %v319, 6
      %v1234 = vperm.slane %v320, 6
      %v1235 = vperm.slane %v321, 6
      %v1236 = vperm.slane %v322, 6
      %v1237 = vperm.slane %v323, 6
      %v1238 = vmul.f32 %v1034, %v1230
      %v1239 = vmul.f32 %v1033, %v1231
      %v1240 = vmul.f32 %v1032, %v1232
      %v1241 = vmul.f32 %v1031, %v1233
      %v1242 = vmul.f32 %v1030, %v1234
      %v1243 = vmul.f32 %v1029, %v1235
      %v1244 = vmul.f32 %v1028, %v1236
      %v1245 = vmul.f32 %v1035, %v1237
      %v1246 = vperm.slane %v316, 7
      %v1247 = vperm.slane %v317, 7
      %v1248 = vperm.slane %v318, 7
      %v1249 = vperm.slane %v319, 7
      %v1250 = vperm.slane %v320, 7
      %v1251 = vperm.slane %v321, 7
      %v1252 = vperm.slane %v322, 7
      %v1253 = vperm.slane %v323, 7
      %v1254 = vmul.f32 %v1074, %v1246
      %v1255 = vmul.f32 %v1073, %v1247
      %v1256 = vmul.f32 %v1072, %v1248
      %v1257 = vmul.f32 %v1071, %v1249
      %v1258 = vmul.f32 %v1070, %v1250
      %v1259 = vmul.f32 %v1069, %v1251
      %v1260 = vmul.f32 %v1068, %v1252
      %v1261 = vmul.f32 %v1075, %v1253
      %v1262 = vperm.slane %v324, 0
      %v1263 = vperm.slane %v325, 0
      %v1264 = vperm.slane %v326, 0
      %v1265 = vperm.slane %v327, 0
      %v1266 = vperm.slane %v328, 0
      %v1267 = vperm.slane %v329, 0
      %v1268 = vperm.slane %v330, 0
      %v1269 = vperm.slane %v331, 0
      %v1270 = vmul.f32 %v1115, %v1262
      %v1271 = vmul.f32 %v1114, %v1263
      %v1272 = vmul.f32 %v1113, %v1264
      %v1273 = vmul.f32 %v1112, %v1265
      %v1274 = vmul.f32 %v1111, %v1266
      %v1275 = vmul.f32 %v1110, %v1267
      %v1276 = vmul.f32 %v1109, %v1268
      %v1277 = vmul.f32 %v1116, %v1269
      %v1278 = vpack.c.bf16 %v1084, %v1044
      %v1279 = vpack.c.bf16 %v1085, %v1045
      %v1280 = vpack.c.bf16 %v1086, %v1046
      %v1281 = vpack.c.bf16 %v1087, %v1047
      %v1282 = vpack.c.bf16 %v1088, %v1048
      %v1283 = vpack.c.bf16 %v1089, %v1049
      %v1284 = vpack.c.bf16 %v1090, %v1050
      %v1285 = vpack.c.bf16 %v1091, %v1051
      %v1286 = vpack.c.bf16 %v1165, %v1125
      %v1287 = vpack.c.bf16 %v1166, %v1126
      %v1288 = vpack.c.bf16 %v1167, %v1127
      %v1289 = vpack.c.bf16 %v1168, %v1128
      %v1290 = vpack.c.bf16 %v1169, %v1129
      %v1291 = vpack.c.bf16 %v1170, %v1130
      %v1292 = vpack.c.bf16 %v1171, %v1131
      %v1293 = vpack.c.bf16 %v1172, %v1132
      %v1294 = vpack.c.bf16 %v1222, %v1181
      %v1295 = vpack.c.bf16 %v1223, %v1182
      %v1296 = vpack.c.bf16 %v1224, %v1183
      %v1297 = vpack.c.bf16 %v1225, %v1184
      %v1298 = vpack.c.bf16 %v1226, %v1185
      %v1299 = vpack.c.bf16 %v1227, %v1186
      %v1300 = vpack.c.bf16 %v1228, %v1187
      %v1301 = vpack.c.bf16 %v1229, %v1188
      %v1302 = vpack.c.bf16 %v1254, %v1238
      %v1303 = vpack.c.bf16 %v1255, %v1239
      %v1304 = vpack.c.bf16 %v1256, %v1240
      %v1305 = vpack.c.bf16 %v1257, %v1241
      %v1306 = vpack.c.bf16 %v1258, %v1242
      %v1307 = vpack.c.bf16 %v1259, %v1243
      %v1308 = vpack.c.bf16 %v1260, %v1244
      %v1309 = vpack.c.bf16 %v1261, %v1245
      %v1310 = vpack.c.bf16 %v1270, %v1270
      %v1311 = vpack.c.bf16 %v1271, %v1271
      %v1312 = vpack.c.bf16 %v1272, %v1272
      %v1313 = vpack.c.bf16 %v1273, %v1273
      %v1314 = vpack.c.bf16 %v1274, %v1274
      %v1315 = vpack.c.bf16 %v1275, %v1275
      %v1316 = vpack.c.bf16 %v1276, %v1276
      %v1317 = vpack.c.bf16 %v1277, %v1277
      %v1318 = vld [vmem:[%s5] sm:$0xf]
      %vm1319 = vcmask 588800
      %v1321 = vsel %vm1319, %v1318, 0
      %v1324 = vsel %vm1003, %v1310, 0
      %v1327 = vsel %vm1003, %v1311, 0
      %v1330 = vsel %vm1003, %v1312, 0
      %v1333 = vsel %vm1003, %v1313, 0
      %v1336 = vsel %vm1003, %v1314, 0
      %v1339 = vsel %vm1003, %v1315, 0
      %v1342 = vsel %vm1003, %v1316, 0
      %v1345 = vsel %vm1003, %v1317, 0
      %1347 = vmatpush.bf16.msra.mxu0 0
      %1348 = vmatpush.bf16.msra.mxu0 0
      %1349 = vmatpush.bf16.msra.mxu0 0
      %1350 = vmatpush.bf16.msra.mxu0 %v1324
      %1351 = vmatpush.bf16.msra.mxu0 %v1302
      %1352 = vmatpush.bf16.msra.mxu0 %v1294
      %1353 = vmatpush.bf16.msra.mxu0 %v1286
      %1354 = vmatpush.bf16.msra.mxu0 %v1278
      %1355 = vmatmul.bf16.gmra.mxu0 %v1321
      %v1356 = vpop.f32.mrf.mxu0
      %v1357 = vadd.f32 0.0, %v1356
      %v1358 = vpop.f32.mrf.mxu0
      %1359 = vdwg.mxu0
      %1360 = vmatpush.bf16.msra.mxu0 0
      %1361 = vmatpush.bf16.msra.mxu0 0
      %1362 = vmatpush.bf16.msra.mxu0 0
      %1363 = vmatpush.bf16.msra.mxu0 %v1327
      %1364 = vmatpush.bf16.msra.mxu0 %v1303
      %1365 = vmatpush.bf16.msra.mxu0 %v1295
      %1366 = vmatpush.bf16.msra.mxu0 %v1287
      %1367 = vmatpush.bf16.msra.mxu0 %v1279
      %1368 = vmatmul.bf16.gmra.mxu0 %v1321
      %v1369 = vpop.f32.mrf.mxu0
      %v1370 = vadd.f32 0.0, %v1369
      %v1371 = vpop.f32.mrf.mxu0
      %1372 = vdwg.mxu0
      %1373 = vmatpush.bf16.msra.mxu0 0
      %1374 = vmatpush.bf16.msra.mxu0 0
      %1375 = vmatpush.bf16.msra.mxu0 0
      %1376 = vmatpush.bf16.msra.mxu0 %v1330
      %1377 = vmatpush.bf16.msra.mxu0 %v1304
      %1378 = vmatpush.bf16.msra.mxu0 %v1296
      %1379 = vmatpush.bf16.msra.mxu0 %v1288
      %1380 = vmatpush.bf16.msra.mxu0 %v1280
      %1381 = vmatmul.bf16.gmra.mxu0 %v1321
      %v1382 = vpop.f32.mrf.mxu0
      %v1383 = vadd.f32 0.0, %v1382
      %v1384 = vpop.f32.mrf.mxu0
      %1385 = vdwg.mxu0
      %1386 = vmatpush.bf16.msra.mxu0 0
      %1387 = vmatpush.bf16.msra.mxu0 0
      %1388 = vmatpush.bf16.msra.mxu0 0
      %1389 = vmatpush.bf16.msra.mxu0 %v1333
      %1390 = vmatpush.bf16.msra.mxu0 %v1305
      %1391 = vmatpush.bf16.msra.mxu0 %v1297
      %1392 = vmatpush.bf16.msra.mxu0 %v1289
      %1393 = vmatpush.bf16.msra.mxu0 %v1281
      %1394 = vmatmul.bf16.gmra.mxu0 %v1321
      %v1395 = vpop.f32.mrf.mxu0
      %v1396 = vadd.f32 0.0, %v1395
      %v1397 = vpop.f32.mrf.mxu0
      %1398 = vdwg.mxu0
      %1399 = vmatpush.bf16.msra.mxu0 0
      %1400 = vmatpush.bf16.msra.mxu0 0
      %1401 = vmatpush.bf16.msra.mxu0 0
      %1402 = vmatpush.bf16.msra.mxu0 %v1336
      %1403 = vmatpush.bf16.msra.mxu0 %v1306
      %1404 = vmatpush.bf16.msra.mxu0 %v1298
      %1405 = vmatpush.bf16.msra.mxu0 %v1290
      %1406 = vmatpush.bf16.msra.mxu0 %v1282
      %1407 = vmatmul.bf16.gmra.mxu0 %v1321
      %v1408 = vpop.f32.mrf.mxu0
      %v1409 = vadd.f32 0.0, %v1408
      %v1410 = vpop.f32.mrf.mxu0
      %1411 = vdwg.mxu0
      %1412 = vmatpush.bf16.msra.mxu0 0
      %1413 = vmatpush.bf16.msra.mxu0 0
      %1414 = vmatpush.bf16.msra.mxu0 0
      %1415 = vmatpush.bf16.msra.mxu0 %v1339
      %1416 = vmatpush.bf16.msra.mxu0 %v1307
      %1417 = vmatpush.bf16.msra.mxu0 %v1299
      %1418 = vmatpush.bf16.msra.mxu0 %v1291
      %1419 = vmatpush.bf16.msra.mxu0 %v1283
      %1420 = vmatmul.bf16.gmra.mxu0 %v1321
      %v1421 = vpop.f32.mrf.mxu0
      %v1422 = vadd.f32 0.0, %v1421
      %v1423 = vpop.f32.mrf.mxu0
      %1424 = vdwg.mxu0
      %1425 = vmatpush.bf16.msra.mxu0 0
      %1426 = vmatpush.bf16.msra.mxu0 0
      %1427 = vmatpush.bf16.msra.mxu0 0
      %1428 = vmatpush.bf16.msra.mxu0 %v1342
      %1429 = vmatpush.bf16.msra.mxu0 %v1308
      %1430 = vmatpush.bf16.msra.mxu0 %v1300
      %1431 = vmatpush.bf16.msra.mxu0 %v1292
      %1432 = vmatpush.bf16.msra.mxu0 %v1284
      %1433 = vmatmul.bf16.gmra.mxu0 %v1321
      %v1434 = vpop.f32.mrf.mxu0
      %v1435 = vadd.f32 0.0, %v1434
      %v1436 = vpop.f32.mrf.mxu0
      %1437 = vdwg.mxu0
      %1438 = vmatpush.bf16.msra.mxu0 0
      %1439 = vmatpush.bf16.msra.mxu0 0
      %1440 = vmatpush.bf16.msra.mxu0 0
      %1441 = vmatpush.bf16.msra.mxu0 %v1345
      %1442 = vmatpush.bf16.msra.mxu0 %v1309
      %1443 = vmatpush.bf16.msra.mxu0 %v1301
      %1444 = vmatpush.bf16.msra.mxu0 %v1293
      %1445 = vmatpush.bf16.msra.mxu0 %v1285
      %1446 = vmatmul.bf16.gmra.mxu0 %v1321
      %v1447 = vpop.f32.mrf.mxu0
      %v1448 = vadd.f32 0.0, %v1447
      %v1449 = vpop.f32.mrf.mxu0
      %1450 = vdwg.mxu0
      %v1451 = vadd.f32 %v1357, %v1370
      %v1452 = vadd.f32 %v1451, %v1383
      %v1453 = vadd.f32 %v1452, %v1396
      %v1454 = vadd.f32 %v1453, %v1409
      %v1455 = vadd.f32 %v1454, %v1422
      %v1456 = vadd.f32 %v1455, %v1435
      %v1457 = vadd.f32 %v1456, %v1448
      %1458 = vadd.xlane.f32.xlu0 %v1457
      %v1459 = vpop.xlane.xlu0 %1458
      %v1460 = vmul.f32 %v1459, 0.0009765625
      %v1461 = vsub.f32 %v1357, %v1460
      %v1462 = vsub.f32 %v1370, %v1460
      %v1463 = vsub.f32 %v1383, %v1460
      %v1464 = vsub.f32 %v1396, %v1460
      %v1465 = vsub.f32 %v1409, %v1460
      %v1466 = vsub.f32 %v1422, %v1460
      %v1467 = vsub.f32 %v1435, %v1460
      %v1468 = vsub.f32 %v1448, %v1460
      %v1469 = vmul.f32 %v1461, %v1461
      %v1470 = vmul.f32 %v1462, %v1462
      %v1471 = vmul.f32 %v1463, %v1463
      %v1472 = vmul.f32 %v1464, %v1464
      %v1473 = vmul.f32 %v1465, %v1465
      %v1474 = vmul.f32 %v1466, %v1466
      %v1475 = vmul.f32 %v1467, %v1467
      %v1476 = vmul.f32 %v1468, %v1468
      %v1477 = vadd.f32 %v1469, %v1470
      %v1478 = vadd.f32 %v1477, %v1471
      %v1479 = vadd.f32 %v1478, %v1472
      %v1480 = vadd.f32 %v1479, %v1473
      %v1481 = vadd.f32 %v1480, %v1474
      %v1482 = vadd.f32 %v1481, %v1475
      %v1483 = vadd.f32 %v1482, %v1476
      %1484 = vadd.xlane.f32.xlu0 %v1483
      %v1485 = vpop.xlane.xlu0 %1484
      %v1486 = vmul.f32 %v1485, 0.0009765625
      %v1487 = vadd.f32 %v1486, 1e-05
      %v1488 = vrsqrt.pop %v1487
      %v1489 = vmul.f32 %v1488, %v1487
      %v1490 = vmul.f32 %v1489, %v1488
      %v1491 = vmul.f32 0.5, %v1490
      %v1492 = vsub.f32 1.5, %v1491
      %v1493 = vmul.f32 %v1488, %v1492
      %vm1494 = vweird.f32 %v1487
      %vm1495 = vweird.f32 %v1488
      %vm1496 = vmor %vm1494, %vm1495
      %v1497 = vsel %vm1496, %v1488, %v1493
      %v1498 = vmul.f32 %v1461, %v1497
      %v1499 = vmul.f32 %v1462, %v1497
      %v1500 = vmul.f32 %v1463, %v1497
      %v1501 = vmul.f32 %v1464, %v1497
      %v1502 = vmul.f32 %v1465, %v1497
      %v1503 = vmul.f32 %v1466, %v1497
      %v1504 = vmul.f32 %v1467, %v1497
      %v1505 = vmul.f32 %v1468, %v1497
      %v1506 = vmax.f32 %v1498, 0.0
      %v1507 = vmax.f32 %v1499, 0.0
      %v1508 = vmax.f32 %v1500, 0.0
      %v1509 = vmax.f32 %v1501, 0.0
      %v1510 = vmax.f32 %v1502, 0.0
      %v1511 = vmax.f32 %v1503, 0.0
      %v1512 = vmax.f32 %v1504, 0.0
      %v1513 = vmax.f32 %v1505, 0.0
      %1514 = vrot.lane.b32.xlu0 %v1506, 68
      %v1515 = vpop.permute.xlu0 %1514
      %1516 = vrot.lane.b32.xlu0 %v1507, 68
      %v1517 = vpop.permute.xlu0 %1516
      %1518 = vrot.lane.b32.xlu0 %v1508, 68
      %v1519 = vpop.permute.xlu0 %1518
      %1520 = vrot.lane.b32.xlu0 %v1509, 68
      %v1521 = vpop.permute.xlu0 %1520
      %1522 = vrot.lane.b32.xlu0 %v1510, 68
      %v1523 = vpop.permute.xlu0 %1522
      %1524 = vrot.lane.b32.xlu0 %v1511, 68
      %v1525 = vpop.permute.xlu0 %1524
      %1526 = vrot.lane.b32.xlu0 %v1512, 68
      %v1527 = vpop.permute.xlu0 %1526
      %1528 = vrot.lane.b32.xlu0 %v1513, 68
      %v1529 = vpop.permute.xlu0 %1528
      %v1530 = vsel %vm538, %v1527, %v1529
      %v1531 = vsel %vm538, %v1525, %v1527
      %v1532 = vsel %vm538, %v1523, %v1525
      %v1533 = vsel %vm538, %v1521, %v1523
      %v1534 = vsel %vm538, %v1519, %v1521
      %v1535 = vsel %vm538, %v1517, %v1519
      %v1536 = vsel %vm538, %v1515, %v1517
      %v1537 = vsel %vm538, %v1529, %v1515
      %v1538 = vmul.f32 %v1537, %v1036
      %v1539 = vmul.f32 %v1536, %v1037
      %v1540 = vmul.f32 %v1535, %v1038
      %v1541 = vmul.f32 %v1534, %v1039
      %v1542 = vmul.f32 %v1533, %v1040
      %v1543 = vmul.f32 %v1532, %v1041
      %v1544 = vmul.f32 %v1531, %v1042
      %v1545 = vmul.f32 %v1530, %v1043
      %1546 = vrot.lane.b32.xlu0 %v1506, 64
      %v1547 = vpop.permute.xlu0 %1546
      %1548 = vrot.lane.b32.xlu0 %v1507, 64
      %v1549 = vpop.permute.xlu0 %1548
      %1550 = vrot.lane.b32.xlu0 %v1508, 64
      %v1551 = vpop.permute.xlu0 %1550
      %1552 = vrot.lane.b32.xlu0 %v1509, 64
      %v1553 = vpop.permute.xlu0 %1552
      %1554 = vrot.lane.b32.xlu0 %v1510, 64
      %v1555 = vpop.permute.xlu0 %1554
      %1556 = vrot.lane.b32.xlu0 %v1511, 64
      %v1557 = vpop.permute.xlu0 %1556
      %1558 = vrot.lane.b32.xlu0 %v1512, 64
      %v1559 = vpop.permute.xlu0 %1558
      %1560 = vrot.lane.b32.xlu0 %v1513, 64
      %v1561 = vpop.permute.xlu0 %1560
      %v1562 = vsel %vm579, %v1559, %v1561
      %v1563 = vsel %vm579, %v1557, %v1559
      %v1564 = vsel %vm579, %v1555, %v1557
      %v1565 = vsel %vm579, %v1553, %v1555
      %v1566 = vsel %vm579, %v1551, %v1553
      %v1567 = vsel %vm579, %v1549, %v1551
      %v1568 = vsel %vm579, %v1547, %v1549
      %v1569 = vsel %vm579, %v1561, %v1547
      %v1570 = vmul.f32 %v1569, %v1076
      %v1571 = vmul.f32 %v1568, %v1077
      %v1572 = vmul.f32 %v1567, %v1078
      %v1573 = vmul.f32 %v1566, %v1079
      %v1574 = vmul.f32 %v1565, %v1080
      %v1575 = vmul.f32 %v1564, %v1081
      %v1576 = vmul.f32 %v1563, %v1082
      %v1577 = vmul.f32 %v1562, %v1083
      %1578 = vrot.lane.b32.xlu0 %v1506, 60
      %v1579 = vpop.permute.xlu0 %1578
      %1580 = vrot.lane.b32.xlu0 %v1507, 60
      %v1581 = vpop.permute.xlu0 %1580
      %1582 = vrot.lane.b32.xlu0 %v1508, 60
      %v1583 = vpop.permute.xlu0 %1582
      %1584 = vrot.lane.b32.xlu0 %v1509, 60
      %v1585 = vpop.permute.xlu0 %1584
      %1586 = vrot.lane.b32.xlu0 %v1510, 60
      %v1587 = vpop.permute.xlu0 %1586
      %1588 = vrot.lane.b32.xlu0 %v1511, 60
      %v1589 = vpop.permute.xlu0 %1588
      %1590 = vrot.lane.b32.xlu0 %v1512, 60
      %v1591 = vpop.permute.xlu0 %1590
      %1592 = vrot.lane.b32.xlu0 %v1513, 60
      %v1593 = vpop.permute.xlu0 %1592
      %v1594 = vsel %vm1108, %v1591, %v1593
      %v1595 = vsel %vm1108, %v1589, %v1591
      %v1596 = vsel %vm1108, %v1587, %v1589
      %v1597 = vsel %vm1108, %v1585, %v1587
      %v1598 = vsel %vm1108, %v1583, %v1585
      %v1599 = vsel %vm1108, %v1581, %v1583
      %v1600 = vsel %vm1108, %v1579, %v1581
      %v1601 = vsel %vm1108, %v1593, %v1579
      %v1602 = vmul.f32 %v1601, %v1117
      %v1603 = vmul.f32 %v1600, %v1118
      %v1604 = vmul.f32 %v1599, %v1119
      %v1605 = vmul.f32 %v1598, %v1120
      %v1606 = vmul.f32 %v1597, %v1121
      %v1607 = vmul.f32 %v1596, %v1122
      %v1608 = vmul.f32 %v1595, %v1123
      %v1609 = vmul.f32 %v1594, %v1124
      %1610 = vrot.lane.b32.xlu0 %v1506, 4
      %v1611 = vpop.permute.xlu0 %1610
      %1612 = vrot.lane.b32.xlu0 %v1507, 4
      %v1613 = vpop.permute.xlu0 %1612
      %1614 = vrot.lane.b32.xlu0 %v1508, 4
      %v1615 = vpop.permute.xlu0 %1614
      %1616 = vrot.lane.b32.xlu0 %v1509, 4
      %v1617 = vpop.permute.xlu0 %1616
      %1618 = vrot.lane.b32.xlu0 %v1510, 4
      %v1619 = vpop.permute.xlu0 %1618
      %1620 = vrot.lane.b32.xlu0 %v1511, 4
      %v1621 = vpop.permute.xlu0 %1620
      %1622 = vrot.lane.b32.xlu0 %v1512, 4
      %v1623 = vpop.permute.xlu0 %1622
      %1624 = vrot.lane.b32.xlu0 %v1513, 4
      %v1625 = vpop.permute.xlu0 %1624
      %v1626 = vsel %vm399, %v1623, %v1625
      %v1627 = vsel %vm399, %v1621, %v1623
      %v1628 = vsel %vm399, %v1619, %v1621
      %v1629 = vsel %vm399, %v1617, %v1619
      %v1630 = vsel %vm399, %v1615, %v1617
      %v1631 = vsel %vm399, %v1613, %v1615
      %v1632 = vsel %vm399, %v1611, %v1613
      %v1633 = vsel %vm399, %v1625, %v1611
      %v1634 = vmul.f32 %v1633, %v1157
      %v1635 = vmul.f32 %v1632, %v1158
      %v1636 = vmul.f32 %v1631, %v1159
      %v1637 = vmul.f32 %v1630, %v1160
      %v1638 = vmul.f32 %v1629, %v1161
      %v1639 = vmul.f32 %v1628, %v1162
      %v1640 = vmul.f32 %v1627, %v1163
      %v1641 = vmul.f32 %v1626, %v1164
      %v1642 = vmul.f32 %v1506, %v1173
      %v1643 = vmul.f32 %v1507, %v1174
      %v1644 = vmul.f32 %v1508, %v1175
      %v1645 = vmul.f32 %v1509, %v1176
      %v1646 = vmul.f32 %v1510, %v1177
      %v1647 = vmul.f32 %v1511, %v1178
      %v1648 = vmul.f32 %v1512, %v1179
      %v1649 = vmul.f32 %v1513, %v1180
      %1650 = vrot.lane.b32.xlu0 %v1506, 124
      %v1651 = vpop.permute.xlu0 %1650
      %1652 = vrot.lane.b32.xlu0 %v1507, 124
      %v1653 = vpop.permute.xlu0 %1652
      %1654 = vrot.lane.b32.xlu0 %v1508, 124
      %v1655 = vpop.permute.xlu0 %1654
      %1656 = vrot.lane.b32.xlu0 %v1509, 124
      %v1657 = vpop.permute.xlu0 %1656
      %1658 = vrot.lane.b32.xlu0 %v1510, 124
      %v1659 = vpop.permute.xlu0 %1658
      %1660 = vrot.lane.b32.xlu0 %v1511, 124
      %v1661 = vpop.permute.xlu0 %1660
      %1662 = vrot.lane.b32.xlu0 %v1512, 124
      %v1663 = vpop.permute.xlu0 %1662
      %1664 = vrot.lane.b32.xlu0 %v1513, 124
      %v1665 = vpop.permute.xlu0 %1664
      %v1666 = vsel %vm1205, %v1663, %v1665
      %v1667 = vsel %vm1205, %v1661, %v1663
      %v1668 = vsel %vm1205, %v1659, %v1661
      %v1669 = vsel %vm1205, %v1657, %v1659
      %v1670 = vsel %vm1205, %v1655, %v1657
      %v1671 = vsel %vm1205, %v1653, %v1655
      %v1672 = vsel %vm1205, %v1651, %v1653
      %v1673 = vsel %vm1205, %v1665, %v1651
      %v1674 = vmul.f32 %v1672, %v1214
      %v1675 = vmul.f32 %v1671, %v1215
      %v1676 = vmul.f32 %v1670, %v1216
      %v1677 = vmul.f32 %v1669, %v1217
      %v1678 = vmul.f32 %v1668, %v1218
      %v1679 = vmul.f32 %v1667, %v1219
      %v1680 = vmul.f32 %v1666, %v1220
      %v1681 = vmul.f32 %v1673, %v1221
      %v1682 = vmul.f32 %v1536, %v1230
      %v1683 = vmul.f32 %v1535, %v1231
      %v1684 = vmul.f32 %v1534, %v1232
      %v1685 = vmul.f32 %v1533, %v1233
      %v1686 = vmul.f32 %v1532, %v1234
      %v1687 = vmul.f32 %v1531, %v1235
      %v1688 = vmul.f32 %v1530, %v1236
      %v1689 = vmul.f32 %v1537, %v1237
      %v1690 = vmul.f32 %v1568, %v1246
      %v1691 = vmul.f32 %v1567, %v1247
      %v1692 = vmul.f32 %v1566, %v1248
      %v1693 = vmul.f32 %v1565, %v1249
      %v1694 = vmul.f32 %v1564, %v1250
      %v1695 = vmul.f32 %v1563, %v1251
      %v1696 = vmul.f32 %v1562, %v1252
      %v1697 = vmul.f32 %v1569, %v1253
      %v1698 = vmul.f32 %v1600, %v1262
      %v1699 = vmul.f32 %v1599, %v1263
      %v1700 = vmul.f32 %v1598, %v1264
      %v1701 = vmul.f32 %v1597, %v1265
      %v1702 = vmul.f32 %v1596, %v1266
      %v1703 = vmul.f32 %v1595, %v1267
      %v1704 = vmul.f32 %v1594, %v1268
      %v1705 = vmul.f32 %v1601, %v1269
      %v1706 = vpack.c.bf16 %v1570, %v1538
      %v1707 = vpack.c.bf16 %v1571, %v1539
      %v1708 = vpack.c.bf16 %v1572, %v1540
      %v1709 = vpack.c.bf16 %v1573, %v1541
      %v1710 = vpack.c.bf16 %v1574, %v1542
      %v1711 = vpack.c.bf16 %v1575, %v1543
      %v1712 = vpack.c.bf16 %v1576, %v1544
      %v1713 = vpack.c.bf16 %v1577, %v1545
      %v1714 = vpack.c.bf16 %v1634, %v1602
      %v1715 = vpack.c.bf16 %v1635, %v1603
      %v1716 = vpack.c.bf16 %v1636, %v1604
      %v1717 = vpack.c.bf16 %v1637, %v1605
      %v1718 = vpack.c.bf16 %v1638, %v1606
      %v1719 = vpack.c.bf16 %v1639, %v1607
      %v1720 = vpack.c.bf16 %v1640, %v1608
      %v1721 = vpack.c.bf16 %v1641, %v1609
      %v1722 = vpack.c.bf16 %v1674, %v1642
      %v1723 = vpack.c.bf16 %v1675, %v1643
      %v1724 = vpack.c.bf16 %v1676, %v1644
      %v1725 = vpack.c.bf16 %v1677, %v1645
      %v1726 = vpack.c.bf16 %v1678, %v1646
      %v1727 = vpack.c.bf16 %v1679, %v1647
      %v1728 = vpack.c.bf16 %v1680, %v1648
      %v1729 = vpack.c.bf16 %v1681, %v1649
      %v1730 = vpack.c.bf16 %v1690, %v1682
      %v1731 = vpack.c.bf16 %v1691, %v1683
      %v1732 = vpack.c.bf16 %v1692, %v1684
      %v1733 = vpack.c.bf16 %v1693, %v1685
      %v1734 = vpack.c.bf16 %v1694, %v1686
      %v1735 = vpack.c.bf16 %v1695, %v1687
      %v1736 = vpack.c.bf16 %v1696, %v1688
      %v1737 = vpack.c.bf16 %v1697, %v1689
      %v1738 = vpack.c.bf16 %v1698, %v1698
      %v1739 = vpack.c.bf16 %v1699, %v1699
      %v1740 = vpack.c.bf16 %v1700, %v1700
      %v1741 = vpack.c.bf16 %v1701, %v1701
      %v1742 = vpack.c.bf16 %v1702, %v1702
      %v1743 = vpack.c.bf16 %v1703, %v1703
      %v1744 = vpack.c.bf16 %v1704, %v1704
      %v1745 = vpack.c.bf16 %v1705, %v1705
      %v1746 = vld [vmem:[%s6] sm:$0xf]
      %v1748 = vsel %vm1319, %v1746, 0
      %v1751 = vsel %vm1003, %v1738, 0
      %v1754 = vsel %vm1003, %v1739, 0
      %v1757 = vsel %vm1003, %v1740, 0
      %v1760 = vsel %vm1003, %v1741, 0
      %v1763 = vsel %vm1003, %v1742, 0
      %v1766 = vsel %vm1003, %v1743, 0
      %v1769 = vsel %vm1003, %v1744, 0
      %v1772 = vsel %vm1003, %v1745, 0
      %1774 = vmatpush.bf16.msra.mxu0 0
      %1775 = vmatpush.bf16.msra.mxu0 0
      %1776 = vmatpush.bf16.msra.mxu0 0
      %1777 = vmatpush.bf16.msra.mxu0 %v1751
      %1778 = vmatpush.bf16.msra.mxu0 %v1730
      %1779 = vmatpush.bf16.msra.mxu0 %v1722
      %1780 = vmatpush.bf16.msra.mxu0 %v1714
      %1781 = vmatpush.bf16.msra.mxu0 %v1706
      %1782 = vmatmul.bf16.gmra.mxu0 %v1748
      %v1783 = vpop.f32.mrf.mxu0
      %v1784 = vadd.f32 0.0, %v1783
      %v1785 = vpop.f32.mrf.mxu0
      %1786 = vdwg.mxu0
      %1787 = vmatpush.bf16.msra.mxu0 0
      %1788 = vmatpush.bf16.msra.mxu0 0
      %1789 = vmatpush.bf16.msra.mxu0 0
      %1790 = vmatpush.bf16.msra.mxu0 %v1754
      %1791 = vmatpush.bf16.msra.mxu0 %v1731
      %1792 = vmatpush.bf16.msra.mxu0 %v1723
      %1793 = vmatpush.bf16.msra.mxu0 %v1715
      %1794 = vmatpush.bf16.msra.mxu0 %v1707
      %1795 = vmatmul.bf16.gmra.mxu0 %v1748
      %v1796 = vpop.f32.mrf.mxu0
      %v1797 = vadd.f32 0.0, %v1796
      %v1798 = vpop.f32.mrf.mxu0
      %1799 = vdwg.mxu0
      %1800 = vmatpush.bf16.msra.mxu0 0
      %1801 = vmatpush.bf16.msra.mxu0 0
      %1802 = vmatpush.bf16.msra.mxu0 0
      %1803 = vmatpush.bf16.msra.mxu0 %v1757
      %1804 = vmatpush.bf16.msra.mxu0 %v1732
      %1805 = vmatpush.bf16.msra.mxu0 %v1724
      %1806 = vmatpush.bf16.msra.mxu0 %v1716
      %1807 = vmatpush.bf16.msra.mxu0 %v1708
      %1808 = vmatmul.bf16.gmra.mxu0 %v1748
      %v1809 = vpop.f32.mrf.mxu0
      %v1810 = vadd.f32 0.0, %v1809
      %v1811 = vpop.f32.mrf.mxu0
      %1812 = vdwg.mxu0
      %1813 = vmatpush.bf16.msra.mxu0 0
      %1814 = vmatpush.bf16.msra.mxu0 0
      %1815 = vmatpush.bf16.msra.mxu0 0
      %1816 = vmatpush.bf16.msra.mxu0 %v1760
      %1817 = vmatpush.bf16.msra.mxu0 %v1733
      %1818 = vmatpush.bf16.msra.mxu0 %v1725
      %1819 = vmatpush.bf16.msra.mxu0 %v1717
      %1820 = vmatpush.bf16.msra.mxu0 %v1709
      %1821 = vmatmul.bf16.gmra.mxu0 %v1748
      %v1822 = vpop.f32.mrf.mxu0
      %v1823 = vadd.f32 0.0, %v1822
      %v1824 = vpop.f32.mrf.mxu0
      %1825 = vdwg.mxu0
      %1826 = vmatpush.bf16.msra.mxu0 0
      %1827 = vmatpush.bf16.msra.mxu0 0
      %1828 = vmatpush.bf16.msra.mxu0 0
      %1829 = vmatpush.bf16.msra.mxu0 %v1763
      %1830 = vmatpush.bf16.msra.mxu0 %v1734
      %1831 = vmatpush.bf16.msra.mxu0 %v1726
      %1832 = vmatpush.bf16.msra.mxu0 %v1718
      %1833 = vmatpush.bf16.msra.mxu0 %v1710
      %1834 = vmatmul.bf16.gmra.mxu0 %v1748
      %v1835 = vpop.f32.mrf.mxu0
      %v1836 = vadd.f32 0.0, %v1835
      %v1837 = vpop.f32.mrf.mxu0
      %1838 = vdwg.mxu0
      %1839 = vmatpush.bf16.msra.mxu0 0
      %1840 = vmatpush.bf16.msra.mxu0 0
      %1841 = vmatpush.bf16.msra.mxu0 0
      %1842 = vmatpush.bf16.msra.mxu0 %v1766
      %1843 = vmatpush.bf16.msra.mxu0 %v1735
      %1844 = vmatpush.bf16.msra.mxu0 %v1727
      %1845 = vmatpush.bf16.msra.mxu0 %v1719
      %1846 = vmatpush.bf16.msra.mxu0 %v1711
      %1847 = vmatmul.bf16.gmra.mxu0 %v1748
      %v1848 = vpop.f32.mrf.mxu0
      %v1849 = vadd.f32 0.0, %v1848
      %v1850 = vpop.f32.mrf.mxu0
      %1851 = vdwg.mxu0
      %1852 = vmatpush.bf16.msra.mxu0 0
      %1853 = vmatpush.bf16.msra.mxu0 0
      %1854 = vmatpush.bf16.msra.mxu0 0
      %1855 = vmatpush.bf16.msra.mxu0 %v1769
      %1856 = vmatpush.bf16.msra.mxu0 %v1736
      %1857 = vmatpush.bf16.msra.mxu0 %v1728
      %1858 = vmatpush.bf16.msra.mxu0 %v1720
      %1859 = vmatpush.bf16.msra.mxu0 %v1712
      %1860 = vmatmul.bf16.gmra.mxu0 %v1748
      %v1861 = vpop.f32.mrf.mxu0
      %v1862 = vadd.f32 0.0, %v1861
      %v1863 = vpop.f32.mrf.mxu0
      %1864 = vdwg.mxu0
      %1865 = vmatpush.bf16.msra.mxu0 0
      %1866 = vmatpush.bf16.msra.mxu0 0
      %1867 = vmatpush.bf16.msra.mxu0 0
      %1868 = vmatpush.bf16.msra.mxu0 %v1772
      %1869 = vmatpush.bf16.msra.mxu0 %v1737
      %1870 = vmatpush.bf16.msra.mxu0 %v1729
      %1871 = vmatpush.bf16.msra.mxu0 %v1721
      %1872 = vmatpush.bf16.msra.mxu0 %v1713
      %1873 = vmatmul.bf16.gmra.mxu0 %v1748
      %v1874 = vpop.f32.mrf.mxu0
      %v1875 = vadd.f32 0.0, %v1874
      %v1876 = vpop.f32.mrf.mxu0
      %1877 = vdwg.mxu0
      %v1878 = vadd.f32 %v1784, %v1797
      %v1879 = vadd.f32 %v1878, %v1810
      %v1880 = vadd.f32 %v1879, %v1823
      %v1881 = vadd.f32 %v1880, %v1836
      %v1882 = vadd.f32 %v1881, %v1849
      %v1883 = vadd.f32 %v1882, %v1862
      %v1884 = vadd.f32 %v1883, %v1875
      %1885 = vadd.xlane.f32.xlu0 %v1884
      %v1886 = vpop.xlane.xlu0 %1885
      %v1887 = vmul.f32 %v1886, 0.0009765625
      %v1888 = vsub.f32 %v1784, %v1887
      %v1889 = vsub.f32 %v1797, %v1887
      %v1890 = vsub.f32 %v1810, %v1887
      %v1891 = vsub.f32 %v1823, %v1887
      %v1892 = vsub.f32 %v1836, %v1887
      %v1893 = vsub.f32 %v1849, %v1887
      %v1894 = vsub.f32 %v1862, %v1887
      %v1895 = vsub.f32 %v1875, %v1887
      %v1896 = vmul.f32 %v1888, %v1888
      %v1897 = vmul.f32 %v1889, %v1889
      %v1898 = vmul.f32 %v1890, %v1890
      %v1899 = vmul.f32 %v1891, %v1891
      %v1900 = vmul.f32 %v1892, %v1892
      %v1901 = vmul.f32 %v1893, %v1893
      %v1902 = vmul.f32 %v1894, %v1894
      %v1903 = vmul.f32 %v1895, %v1895
      %v1904 = vadd.f32 %v1896, %v1897
      %v1905 = vadd.f32 %v1904, %v1898
      %v1906 = vadd.f32 %v1905, %v1899
      %v1907 = vadd.f32 %v1906, %v1900
      %v1908 = vadd.f32 %v1907, %v1901
      %v1909 = vadd.f32 %v1908, %v1902
      %v1910 = vadd.f32 %v1909, %v1903
      %1911 = vadd.xlane.f32.xlu0 %v1910
      %v1912 = vpop.xlane.xlu0 %1911
      %v1913 = vmul.f32 %v1912, 0.0009765625
      %v1914 = vadd.f32 %v1913, 1e-05
      %v1915 = vrsqrt.pop %v1914
      %v1916 = vmul.f32 %v1915, %v1914
      %v1917 = vmul.f32 %v1916, %v1915
      %v1918 = vmul.f32 0.5, %v1917
      %v1919 = vsub.f32 1.5, %v1918
      %v1920 = vmul.f32 %v1915, %v1919
      %vm1921 = vweird.f32 %v1914
      %vm1922 = vweird.f32 %v1915
      %vm1923 = vmor %vm1921, %vm1922
      %v1924 = vsel %vm1923, %v1915, %v1920
      %v1925 = vmul.f32 %v1888, %v1924
      %v1926 = vmul.f32 %v1889, %v1924
      %v1927 = vmul.f32 %v1890, %v1924
      %v1928 = vmul.f32 %v1891, %v1924
      %v1929 = vmul.f32 %v1892, %v1924
      %v1930 = vmul.f32 %v1893, %v1924
      %v1931 = vmul.f32 %v1894, %v1924
      %v1932 = vmul.f32 %v1895, %v1924
      %v1933 = vmax.f32 %v1925, 0.0
      %v1934 = vmax.f32 %v1926, 0.0
      %v1935 = vmax.f32 %v1927, 0.0
      %v1936 = vmax.f32 %v1928, 0.0
      %v1937 = vmax.f32 %v1929, 0.0
      %v1938 = vmax.f32 %v1930, 0.0
      %v1939 = vmax.f32 %v1931, 0.0
      %v1940 = vmax.f32 %v1932, 0.0
      %v1949 = vrot.slane %v1934, 4
      %v1950 = vrot.slane %v1936, 4
      %v1951 = vrot.slane %v1938, 4
      %v1952 = vrot.slane %v1940, 4
      %v1953 = vsel %vm1003, %v1933, %v1949
      %v1954 = vsel %vm1003, %v1935, %v1950
      %v1955 = vsel %vm1003, %v1937, %v1951
      %v1956 = vsel %vm1003, %v1939, %v1952
      %1961 = vst [vmem:[%s298] sm:$0xff] %v1953
      %1962 = vst [vmem:[%s298 + $0x8] sm:$0xff] %v1954
      %1963 = vst [vmem:[%s298 + $0x10] sm:$0xff] %v1955
      %1964 = vst [vmem:[%s298 + $0x18] sm:$0xff] %v1956
      %p1965 = scmp.lt.s32.totalorder %s18, 1
      %s1966 = scalar_select %p1965, %s18, 1
      %s1967 = smul.addr %s1966, 8
      %s1968 = smul.addr %s1967, 4
      %s1969 = scalar_lea.vmem %s7, %s1968
      // Predicated region
      $region49: #{unet_up3_forward.1} parent=47 // pred_check
        %p1970 = pneg %p193
      $region50: #{unet_up3_forward.1} parent=47 // pred_check_branch
        %1972 = sbr.rel (%p1970) target = $region52
      $region51: #{unet_up3_forward.1} parent=47 // pred_region
        _
      $region52: #{unet_up3_forward.1} parent=47 // pred_fallthru
        _
    $region48: #{unet_up3_forward.1} parent=5 // pred_fallthru
      _
    %p1973 = scmp.le.s32.totalorder 2, %s13
    // Predicated region
    $region53: #{unet_up3_forward.1} parent=5 // pred_check
      %p1974 = pneg %p1973
    $region54: #{unet_up3_forward.1} parent=5 // pred_check_branch
      %1976 = sbr.rel (%p1974) target = $region56
    $region55: #{unet_up3_forward.1} parent=5 // pred_region
      %s1977 = ssub.s32 %s13, 2
      // Predicated region
      $region57: #{unet_up3_forward.1} parent=55 // pred_check
        %p1978 = pneg %p199
      $region58: #{unet_up3_forward.1} parent=55 // pred_check_branch
        %1980 = sbr.rel (%p1978) target = $region60
      $region59: #{unet_up3_forward.1} parent=55 // pred_region
        %p1981 = scmp.lt.s32.totalorder %s19, 1
        %s1982 = scalar_select %p1981, %s19, 1
        %s1983 = smul.addr %s1982, 8
        %s1984 = smul.addr %s1983, 4
        %s1985 = scalar_lea.vmem %s7, %s1984
      $region60: #{unet_up3_forward.1} parent=55 // pred_fallthru
        _
    $region56: #{unet_up3_forward.1} parent=5 // pred_fallthru
      _
  $region6: #{unet_up3_forward.1} parent=0 // loop_footer
    %s17 = sadd.s32 1, %s13
  $region7: #{unet_up3_forward.1} parent=0 // loop_footer_branch
    %12 = sbr.rel target = $region3
  $region8: #{unet_up3_forward.1} parent=0 // loop_exit
    _

</llo_original>
